<compile_context>
chip_gen: v7x
topology: tpu7x:2x2x1
jax: 0.10.0
libtpu: 0.0.40
codegen_flags: <defaults>
</compile_context>

<pallas_src>
import functools

import jax
import jax.numpy as jnp
from jax import lax
from jax.experimental import pallas as pl
from jax.experimental.pallas import tpu as pltpu


def _round_up(x, m):
    return (x + m - 1) // m * m


def _graph_constructor_kernel(e1_ref, e2_ref, w1t_ref, b1_ref, w2t_ref, b2_ref,
                              noise_ref, adj_ref, full_ref, *, alpha, k, n_valid):
    f32 = jnp.float32
    e1 = e1_ref[...].astype(f32)          # (Np, Dp)
    e2 = e2_ref[...].astype(f32)
    w1t = w1t_ref[...].astype(f32)        # (Dp, Dp), already transposed (in, out)
    w2t = w2t_ref[...].astype(f32)
    b1 = b1_ref[...].astype(f32)          # (1, Dp)
    b2 = b2_ref[...].astype(f32)

    nv1 = jnp.tanh(alpha * (jnp.dot(e1, w1t, preferred_element_type=f32) + b1))
    nv2 = jnp.tanh(alpha * (jnp.dot(e2, w2t, preferred_element_type=f32) + b2))

    # a = nv1 @ nv2^T - nv2 @ nv1^T   (contract last dims directly on the MXU)
    dnums = (((1,), (1,)), ((), ()))
    m1 = lax.dot_general(nv1, nv2, dnums, preferred_element_type=f32)   # (Np, Np)
    m2 = lax.dot_general(nv2, nv1, dnums, preferred_element_type=f32)
    adj = jnp.maximum(jnp.tanh(alpha * (m1 - m2)), 0.0)

    # Validity mask for padded columns (rows are sliced off in the wrapper).
    col_valid = lax.broadcasted_iota(jnp.int32, adj.shape, 1) < n_valid

    # Per-row top-k as a threshold: after k max-removal rounds, thr holds the
    # k-th largest score of each row.  adj >= 0 and noise >= 0, so -1 padding
    # can never be selected.
    scores = adj + noise_ref[...].astype(f32) * 0.01
    scores = jnp.where(col_valid, scores, -1.0)
    work = scores
    thr = scores[:, :1]  # placeholder; overwritten in first iteration (k >= 1)
    for _ in range(k):
        thr = jnp.max(work, axis=-1, keepdims=True)       # lane-axis reduce (XLU)
        work = jnp.where(work >= thr, -jnp.inf, work)
    mask = (scores >= thr) & col_valid

    full_ref[...] = jnp.where(col_valid, adj, 0.0).astype(full_ref.dtype)
    adj_ref[...] = jnp.where(mask, adj, 0.0).astype(adj_ref.dtype)


def graph_constructor_forward(idx, emb1, emb2, w1, b1, w2, b2, *, k, alpha=3.0,
                              noise=None, key=None):
    """Pallas port of graph_constructor.forward (learned-embedding path).

    idx: (N,) int32 node indices; emb1/emb2: (nnodes, dim) embedding tables;
    w1,b1,w2,b2: nn.Linear(dim, dim) params with w* shaped (out, in).
    Returns (adj, adj_full): the top-k-masked adjacency (module.forward) and
    the unmasked adjacency (module.fullA), each of shape (N, N), float32.
    """
    assert k >= 1
    # Glue: embedding gather  emb(idx).
    e1 = jnp.take(emb1, idx, axis=0).astype(jnp.float32)   # (N, D)
    e2 = jnp.take(emb2, idx, axis=0).astype(jnp.float32)
    N, D = e1.shape

    if noise is None:
        if key is None:
            key = jax.random.PRNGKey(0)
        noise = jax.random.uniform(key, (N, N), dtype=jnp.float32)  # torch.rand_like

    # Lane-dense padding: last dims -> multiples of 128.
    Np = _round_up(max(N, 8), 128)
    Dp = _round_up(max(D, 8), 128)

    def pad2(x, r, c):
        return jnp.pad(x, ((0, r - x.shape[0]), (0, c - x.shape[1])))

    e1p = pad2(e1, Np, Dp)
    e2p = pad2(e2, Np, Dp)
    w1tp = pad2(jnp.asarray(w1, jnp.float32).T, Dp, Dp)
    w2tp = pad2(jnp.asarray(w2, jnp.float32).T, Dp, Dp)
    b1p = pad2(jnp.asarray(b1, jnp.float32).reshape(1, D), 1, Dp)
    b2p = pad2(jnp.asarray(b2, jnp.float32).reshape(1, D), 1, Dp)
    noisep = pad2(jnp.asarray(noise, jnp.float32), Np, Np)

    kernel = functools.partial(_graph_constructor_kernel,
                               alpha=float(alpha), k=int(k), n_valid=N)

    def blk(r, c):
        return pl.BlockSpec((r, c), lambda i: (0, 0))

    adj_p, full_p = pl.pallas_call(
        kernel,
        out_shape=(jax.ShapeDtypeStruct((Np, Np), jnp.float32),
                   jax.ShapeDtypeStruct((Np, Np), jnp.float32)),
        grid=(1,),
        in_specs=[
            blk(Np, Dp), blk(Np, Dp),          # gathered embeddings
            blk(Dp, Dp), blk(1, Dp),           # lin1 (W^T, b)
            blk(Dp, Dp), blk(1, Dp),           # lin2 (W^T, b)
            blk(Np, Np),                       # tie-break noise
        ],
        out_specs=(blk(Np, Np), blk(Np, Np)),
        compiler_params=pltpu.CompilerParams(
            dimension_semantics=("arbitrary",),
        ),
    )(e1p, e2p, w1tp, b1p, w2tp, b2p, noisep)

    return adj_p[:N, :N], full_p[:N, :N]


# ----------------------------- pure-JAX reference -----------------------------

def _reference_full(idx, emb1, emb2, w1, b1, w2, b2, alpha):
    e1 = emb1[idx]
    e2 = emb2[idx]
    nv1 = jnp.tanh(alpha * (e1 @ w1.T + b1))
    nv2 = jnp.tanh(alpha * (e2 @ w2.T + b2))
    a = nv1 @ nv2.T - nv2 @ nv1.T
    return jax.nn.relu(jnp.tanh(alpha * a))


def _topk_mask(adj_full, noise, k):
    scores = adj_full + noise * 0.01
    _, t1 = lax.top_k(scores, k)
    rows = jnp.arange(adj_full.shape[0])[:, None]
    mask = jnp.zeros_like(adj_full).at[rows, t1].set(1.0)
    return adj_full * mask


if __name__ == "__main__":
    key = jax.random.PRNGKey(0)
    k_e1, k_e2, k_w1, k_b1, k_w2, k_b2, k_idx, k_noise = jax.random.split(key, 8)

    nnodes, dim, n_sel, topk, alpha = 40, 32, 24, 8, 3.0

    emb1 = jax.random.normal(k_e1, (nnodes, dim), jnp.float32)
    emb2 = jax.random.normal(k_e2, (nnodes, dim), jnp.float32)
    w1 = jax.random.normal(k_w1, (dim, dim), jnp.float32) / jnp.sqrt(dim)
    b1 = 0.1 * jax.random.normal(k_b1, (dim,), jnp.float32)
    w2 = jax.random.normal(k_w2, (dim, dim), jnp.float32) / jnp.sqrt(dim)
    b2 = 0.1 * jax.random.normal(k_b2, (dim,), jnp.float32)
    idx = jax.random.permutation(k_idx, nnodes)[:n_sel].astype(jnp.int32)
    noise = jax.random.uniform(k_noise, (n_sel, n_sel), dtype=jnp.float32)

    adj, adj_full = graph_constructor_forward(
        idx, emb1, emb2, w1, b1, w2, b2, k=topk, alpha=alpha, noise=noise)
    adj = jax.block_until_ready(adj)
    adj_full = jax.block_until_ready(adj_full)

    assert adj.shape == (n_sel, n_sel) and adj_full.shape == (n_sel, n_sel)

    # 1) compute path (embeddings -> linears -> tanh -> adjacency) vs pure JAX.
    ref_full = _reference_full(idx, emb1, emb2, w1, b1, w2, b2, alpha)
    assert jnp.allclose(adj_full, ref_full, atol=1e-4, rtol=1e-4)

    # 2) top-k masking path, checked bit-exactly on the kernel's own adjacency
    #    (same score matrix => same selected set as torch's topk+scatter).
    expected_masked = _topk_mask(adj_full, noise, topk)
    assert jnp.allclose(adj, expected_masked, atol=1e-6, rtol=0.0)

    # 3) at most k surviving entries per row.
    assert int(jnp.max(jnp.sum(adj != 0, axis=1))) <= topk

    print("KERNEL_OK")
</pallas_src>

<mosaic_0001>
module attributes {stable_mosaic.version = 11 : i64} {
  func.func @_graph_constructor_kernel(%arg0: i32, %arg1: memref<128x128xf32, #tpu.memory_space<vmem>>, %arg2: memref<128x128xf32, #tpu.memory_space<vmem>>, %arg3: memref<128x128xf32, #tpu.memory_space<vmem>>, %arg4: memref<1x128xf32, #tpu.memory_space<vmem>>, %arg5: memref<128x128xf32, #tpu.memory_space<vmem>>, %arg6: memref<1x128xf32, #tpu.memory_space<vmem>>, %arg7: memref<128x128xf32, #tpu.memory_space<vmem>>, %arg8: memref<128x128xf32, #tpu.memory_space<vmem>>, %arg9: memref<128x128xf32, #tpu.memory_space<vmem>>) attributes {dimension_semantics = [#tpu.dimension_semantics<arbitrary>], iteration_bounds = array<i64: 1>, scalar_prefetch = 0 : i64, scratch_operands = 0 : i64, tpu.core_type = #tpu.core_type<tc>, window_params = [{pipeline_mode = #tpu.pipeline_mode<synchronous>, transform_indices = @transform_0, window_bounds = array<i64: 128, 128>}, {pipeline_mode = #tpu.pipeline_mode<synchronous>, transform_indices = @transform_1, window_bounds = array<i64: 128, 128>}, {pipeline_mode = #tpu.pipeline_mode<synchronous>, transform_indices = @transform_2, window_bounds = array<i64: 128, 128>}, {pipeline_mode = #tpu.pipeline_mode<synchronous>, transform_indices = @transform_3, window_bounds = array<i64: 1, 128>}, {pipeline_mode = #tpu.pipeline_mode<synchronous>, transform_indices = @transform_4, window_bounds = array<i64: 128, 128>}, {pipeline_mode = #tpu.pipeline_mode<synchronous>, transform_indices = @transform_5, window_bounds = array<i64: 1, 128>}, {pipeline_mode = #tpu.pipeline_mode<synchronous>, transform_indices = @transform_6, window_bounds = array<i64: 128, 128>}, {pipeline_mode = #tpu.pipeline_mode<synchronous>, transform_indices = @transform_7, window_bounds = array<i64: 128, 128>}, {pipeline_mode = #tpu.pipeline_mode<synchronous>, transform_indices = @transform_8, window_bounds = array<i64: 128, 128>}]} {
    %c0 = arith.constant 0 : index
    %c0_0 = arith.constant 0 : index
    %0 = vector.load %arg1[%c0, %c0_0] : memref<128x128xf32, #tpu.memory_space<vmem>>, vector<128x128xf32>
    %c0_1 = arith.constant 0 : index
    %c0_2 = arith.constant 0 : index
    %1 = vector.load %arg2[%c0_1, %c0_2] : memref<128x128xf32, #tpu.memory_space<vmem>>, vector<128x128xf32>
    %c0_3 = arith.constant 0 : index
    %c0_4 = arith.constant 0 : index
    %2 = vector.load %arg3[%c0_3, %c0_4] : memref<128x128xf32, #tpu.memory_space<vmem>>, vector<128x128xf32>
    %c0_5 = arith.constant 0 : index
    %c0_6 = arith.constant 0 : index
    %3 = vector.load %arg5[%c0_5, %c0_6] : memref<128x128xf32, #tpu.memory_space<vmem>>, vector<128x128xf32>
    %c0_7 = arith.constant 0 : index
    %c0_8 = arith.constant 0 : index
    %4 = vector.load %arg4[%c0_7, %c0_8] : memref<1x128xf32, #tpu.memory_space<vmem>>, vector<1x128xf32>
    %c0_9 = arith.constant 0 : index
    %c0_10 = arith.constant 0 : index
    %5 = vector.load %arg6[%c0_9, %c0_10] : memref<1x128xf32, #tpu.memory_space<vmem>>, vector<1x128xf32>
    %cst = arith.constant dense<0.000000e+00> : vector<128x128xf32>
    %6 = tpu.matmul %0, %2, %cst {dimension_numbers = #tpu.dot_dimension_numbers<[1], [0], [0], [1], [0, 0, 1, 1], [], []>} : vector<128x128xf32>, vector<128x128xf32>, vector<128x128xf32> -> vector<128x128xf32>
    %7 = vector.broadcast %4 : vector<1x128xf32> to vector<128x128xf32>
    %8 = arith.addf %6, %7 : vector<128x128xf32>
    %cst_11 = arith.constant 3.000000e+00 : f32
    %9 = vector.broadcast %cst_11 : f32 to vector<128x128xf32>
    %10 = arith.mulf %9, %8 : vector<128x128xf32>
    %11 = math.tanh %10 : vector<128x128xf32>
    %cst_12 = arith.constant dense<0.000000e+00> : vector<128x128xf32>
    %12 = tpu.matmul %1, %3, %cst_12 {dimension_numbers = #tpu.dot_dimension_numbers<[1], [0], [0], [1], [0, 0, 1, 1], [], []>} : vector<128x128xf32>, vector<128x128xf32>, vector<128x128xf32> -> vector<128x128xf32>
    %13 = vector.broadcast %5 : vector<1x128xf32> to vector<128x128xf32>
    %14 = arith.addf %12, %13 : vector<128x128xf32>
    %cst_13 = arith.constant 3.000000e+00 : f32
    %15 = vector.broadcast %cst_13 : f32 to vector<128x128xf32>
    %16 = arith.mulf %15, %14 : vector<128x128xf32>
    %17 = math.tanh %16 : vector<128x128xf32>
    %cst_14 = arith.constant dense<0.000000e+00> : vector<128x128xf32>
    %18 = tpu.matmul %11, %17, %cst_14 {dimension_numbers = #tpu.dot_dimension_numbers<[1], [1], [0], [0], [0, 0, 1, 0], [], []>} : vector<128x128xf32>, vector<128x128xf32>, vector<128x128xf32> -> vector<128x128xf32>
    %cst_15 = arith.constant dense<0.000000e+00> : vector<128x128xf32>
    %19 = tpu.matmul %17, %11, %cst_15 {dimension_numbers = #tpu.dot_dimension_numbers<[1], [1], [0], [0], [0, 0, 1, 0], [], []>} : vector<128x128xf32>, vector<128x128xf32>, vector<128x128xf32> -> vector<128x128xf32>
    %20 = arith.subf %18, %19 : vector<128x128xf32>
    %cst_16 = arith.constant 3.000000e+00 : f32
    %21 = vector.broadcast %cst_16 : f32 to vector<128x128xf32>
    %22 = arith.mulf %21, %20 : vector<128x128xf32>
    %23 = math.tanh %22 : vector<128x128xf32>
    %cst_17 = arith.constant 0.000000e+00 : f32
    %24 = vector.broadcast %cst_17 : f32 to vector<128x128xf32>
    %25 = arith.maximumf %23, %24 : vector<128x128xf32>
    %26 = tpu.iota {dimensions = array<i32: 1>} : vector<128x128xi32>
    %c24_i32 = arith.constant 24 : i32
    %27 = vector.broadcast %c24_i32 : i32 to vector<128x128xi32>
    %28 = arith.cmpi slt, %26, %27 : vector<128x128xi32>
    %c0_18 = arith.constant 0 : index
    %c0_19 = arith.constant 0 : index
    %29 = vector.load %arg7[%c0_18, %c0_19] : memref<128x128xf32, #tpu.memory_space<vmem>>, vector<128x128xf32>
    %cst_20 = arith.constant 0.00999999977 : f32
    %30 = vector.broadcast %cst_20 : f32 to vector<128x128xf32>
    %31 = arith.mulf %29, %30 : vector<128x128xf32>
    %32 = arith.addf %25, %31 : vector<128x128xf32>
    %cst_21 = arith.constant -1.000000e+00 : f32
    %33 = vector.broadcast %cst_21 : f32 to vector<128x128xf32>
    %34 = arith.select %28, %32, %33 : vector<128x128xi1>, vector<128x128xf32>
    %cst_22 = arith.constant dense<0xFF800000> : vector<128xf32>
    %35 = vector.multi_reduction <maximumf>, %34, %cst_22 [1] : vector<128x128xf32> to vector<128xf32>
    %36 = vector.shape_cast %35 : vector<128xf32> to vector<128x1xf32>
    %37 = vector.broadcast %36 : vector<128x1xf32> to vector<128x128xf32>
    %38 = arith.cmpf oge, %34, %37 : vector<128x128xf32>
    %cst_23 = arith.constant 0xFF800000 : f32
    %39 = vector.broadcast %cst_23 : f32 to vector<128x128xf32>
    %40 = arith.select %38, %39, %34 : vector<128x128xi1>, vector<128x128xf32>
    %cst_24 = arith.constant dense<0xFF800000> : vector<128xf32>
    %41 = vector.multi_reduction <maximumf>, %40, %cst_24 [1] : vector<128x128xf32> to vector<128xf32>
    %42 = vector.shape_cast %41 : vector<128xf32> to vector<128x1xf32>
    %43 = vector.broadcast %42 : vector<128x1xf32> to vector<128x128xf32>
    %44 = arith.cmpf oge, %40, %43 : vector<128x128xf32>
    %cst_25 = arith.constant 0xFF800000 : f32
    %45 = vector.broadcast %cst_25 : f32 to vector<128x128xf32>
    %46 = arith.select %44, %45, %40 : vector<128x128xi1>, vector<128x128xf32>
    %cst_26 = arith.constant dense<0xFF800000> : vector<128xf32>
    %47 = vector.multi_reduction <maximumf>, %46, %cst_26 [1] : vector<128x128xf32> to vector<128xf32>
    %48 = vector.shape_cast %47 : vector<128xf32> to vector<128x1xf32>
    %49 = vector.broadcast %48 : vector<128x1xf32> to vector<128x128xf32>
    %50 = arith.cmpf oge, %46, %49 : vector<128x128xf32>
    %cst_27 = arith.constant 0xFF800000 : f32
    %51 = vector.broadcast %cst_27 : f32 to vector<128x128xf32>
    %52 = arith.select %50, %51, %46 : vector<128x128xi1>, vector<128x128xf32>
    %cst_28 = arith.constant dense<0xFF800000> : vector<128xf32>
    %53 = vector.multi_reduction <maximumf>, %52, %cst_28 [1] : vector<128x128xf32> to vector<128xf32>
    %54 = vector.shape_cast %53 : vector<128xf32> to vector<128x1xf32>
    %55 = vector.broadcast %54 : vector<128x1xf32> to vector<128x128xf32>
    %56 = arith.cmpf oge, %52, %55 : vector<128x128xf32>
    %cst_29 = arith.constant 0xFF800000 : f32
    %57 = vector.broadcast %cst_29 : f32 to vector<128x128xf32>
    %58 = arith.select %56, %57, %52 : vector<128x128xi1>, vector<128x128xf32>
    %cst_30 = arith.constant dense<0xFF800000> : vector<128xf32>
    %59 = vector.multi_reduction <maximumf>, %58, %cst_30 [1] : vector<128x128xf32> to vector<128xf32>
    %60 = vector.shape_cast %59 : vector<128xf32> to vector<128x1xf32>
    %61 = vector.broadcast %60 : vector<128x1xf32> to vector<128x128xf32>
    %62 = arith.cmpf oge, %58, %61 : vector<128x128xf32>
    %cst_31 = arith.constant 0xFF800000 : f32
    %63 = vector.broadcast %cst_31 : f32 to vector<128x128xf32>
    %64 = arith.select %62, %63, %58 : vector<128x128xi1>, vector<128x128xf32>
    %cst_32 = arith.constant dense<0xFF800000> : vector<128xf32>
    %65 = vector.multi_reduction <maximumf>, %64, %cst_32 [1] : vector<128x128xf32> to vector<128xf32>
    %66 = vector.shape_cast %65 : vector<128xf32> to vector<128x1xf32>
    %67 = vector.broadcast %66 : vector<128x1xf32> to vector<128x128xf32>
    %68 = arith.cmpf oge, %64, %67 : vector<128x128xf32>
    %cst_33 = arith.constant 0xFF800000 : f32
    %69 = vector.broadcast %cst_33 : f32 to vector<128x128xf32>
    %70 = arith.select %68, %69, %64 : vector<128x128xi1>, vector<128x128xf32>
    %cst_34 = arith.constant dense<0xFF800000> : vector<128xf32>
    %71 = vector.multi_reduction <maximumf>, %70, %cst_34 [1] : vector<128x128xf32> to vector<128xf32>
    %72 = vector.shape_cast %71 : vector<128xf32> to vector<128x1xf32>
    %73 = vector.broadcast %72 : vector<128x1xf32> to vector<128x128xf32>
    %74 = arith.cmpf oge, %70, %73 : vector<128x128xf32>
    %cst_35 = arith.constant 0xFF800000 : f32
    %75 = vector.broadcast %cst_35 : f32 to vector<128x128xf32>
    %76 = arith.select %74, %75, %70 : vector<128x128xi1>, vector<128x128xf32>
    %cst_36 = arith.constant dense<0xFF800000> : vector<128xf32>
    %77 = vector.multi_reduction <maximumf>, %76, %cst_36 [1] : vector<128x128xf32> to vector<128xf32>
    %78 = vector.shape_cast %77 : vector<128xf32> to vector<128x1xf32>
    %79 = vector.broadcast %78 : vector<128x1xf32> to vector<128x128xf32>
    %80 = arith.cmpf oge, %34, %79 : vector<128x128xf32>
    %81 = arith.andi %80, %28 : vector<128x128xi1>
    %cst_37 = arith.constant 0.000000e+00 : f32
    %82 = vector.broadcast %cst_37 : f32 to vector<128x128xf32>
    %83 = arith.select %28, %25, %82 : vector<128x128xi1>, vector<128x128xf32>
    %c0_38 = arith.constant 0 : index
    %c0_39 = arith.constant 0 : index
    %84 = vector.load %arg9[%c0_38, %c0_39] : memref<128x128xf32, #tpu.memory_space<vmem>>, vector<128x128xf32>
    tpu.vector_store %arg9[%c0_38, %c0_39], %83 {strides = array<i32>} : memref<128x128xf32, #tpu.memory_space<vmem>>, vector<128x128xf32>,
    %cst_40 = arith.constant 0.000000e+00 : f32
    %85 = vector.broadcast %cst_40 : f32 to vector<128x128xf32>
    %86 = arith.select %81, %25, %85 : vector<128x128xi1>, vector<128x128xf32>
    %c0_41 = arith.constant 0 : index
    %c0_42 = arith.constant 0 : index
    %87 = vector.load %arg8[%c0_41, %c0_42] : memref<128x128xf32, #tpu.memory_space<vmem>>, vector<128x128xf32>
    tpu.vector_store %arg8[%c0_41, %c0_42], %86 {strides = array<i32>} : memref<128x128xf32, #tpu.memory_space<vmem>>, vector<128x128xf32>,
    return
  }
  func.func @transform_0(%arg0: i32) -> (i32, i32) {
    %c0_i32 = arith.constant 0 : i32
    %c0_i32_0 = arith.constant 0 : i32
    %c0_i32_1 = arith.constant 0 : i32
    return %c0_i32, %c0_i32_0 : i32, i32
  }
  func.func @transform_1(%arg0: i32) -> (i32, i32) {
    %c0_i32 = arith.constant 0 : i32
    %c0_i32_0 = arith.constant 0 : i32
    %c0_i32_1 = arith.constant 0 : i32
    return %c0_i32, %c0_i32_0 : i32, i32
  }
  func.func @transform_2(%arg0: i32) -> (i32, i32) {
    %c0_i32 = arith.constant 0 : i32
    %c0_i32_0 = arith.constant 0 : i32
    %c0_i32_1 = arith.constant 0 : i32
    return %c0_i32, %c0_i32_0 : i32, i32
  }
  func.func @transform_3(%arg0: i32) -> (i32, i32) {
    %c0_i32 = arith.constant 0 : i32
    %c0_i32_0 = arith.constant 0 : i32
    %c0_i32_1 = arith.constant 0 : i32
    return %c0_i32, %c0_i32_0 : i32, i32
  }
  func.func @transform_4(%arg0: i32) -> (i32, i32) {
    %c0_i32 = arith.constant 0 : i32
    %c0_i32_0 = arith.constant 0 : i32
    %c0_i32_1 = arith.constant 0 : i32
    return %c0_i32, %c0_i32_0 : i32, i32
  }
  func.func @transform_5(%arg0: i32) -> (i32, i32) {
    %c0_i32 = arith.constant 0 : i32
    %c0_i32_0 = arith.constant 0 : i32
    %c0_i32_1 = arith.constant 0 : i32
    return %c0_i32, %c0_i32_0 : i32, i32
  }
  func.func @transform_6(%arg0: i32) -> (i32, i32) {
    %c0_i32 = arith.constant 0 : i32
    %c0_i32_0 = arith.constant 0 : i32
    %c0_i32_1 = arith.constant 0 : i32
    return %c0_i32, %c0_i32_0 : i32, i32
  }
  func.func @transform_7(%arg0: i32) -> (i32, i32) {
    %c0_i32 = arith.constant 0 : i32
    %c0_i32_0 = arith.constant 0 : i32
    %c0_i32_1 = arith.constant 0 : i32
    return %c0_i32, %c0_i32_0 : i32, i32
  }
  func.func @transform_8(%arg0: i32) -> (i32, i32) {
    %c0_i32 = arith.constant 0 : i32
    %c0_i32_0 = arith.constant 0 : i32
    %c0_i32_1 = arith.constant 0 : i32
    return %c0_i32, %c0_i32_0 : i32, i32
  }
}

</mosaic_0001>

<llo_original>
// kernel: tpu_custom_call.1
$region0: #{tpu_custom_call.1}
  #allocation0 [shape = 'u32[]', space=smem, size = 0x4, offset = 0x4, fixed_abs, tag = 'smem constant byte address 0x4 - core index']
  #allocation1 [shape = 'u32[144,128]{1,0:T(1,128)}', space=vmem, size = 0x12000, scoped, tag = 'internal scratch']
  %s0 = inlined_call_operand.hbm [shape: f32[128,128], index: 0, kind: input, shape index: {}]
  %s1 = inlined_call_operand.hbm [shape: f32[128,128], index: 1, kind: input, shape index: {}]
  %s2 = inlined_call_operand.hbm [shape: f32[128,128], index: 2, kind: input, shape index: {}]
  %s3 = inlined_call_operand.vmem [shape: f32[1,128], index: 3, kind: input, shape index: {}]
  %s4 = inlined_call_operand.hbm [shape: f32[128,128], index: 4, kind: input, shape index: {}]
  %s5 = inlined_call_operand.vmem [shape: f32[1,128], index: 5, kind: input, shape index: {}]
  %s6 = inlined_call_operand.hbm [shape: f32[128,128], index: 6, kind: input, shape index: {}]
  %s7 = inlined_call_operand.hbm [shape: f32[128,128], index: 7, kind: output, shape index: {0}]
  %s8 = inlined_call_operand.hbm [shape: f32[128,128], index: 8, kind: output, shape index: {1}]
  %9 = xla_tuple %s7, %s8
  %s10 = sld [smem:[#allocation0]]
  $region66: #{tpu_custom_call.1} parent=0
    _
  %s12 = ssub.s32 1, %s10
  %s13 = scalar_select 0, %s12, %s10
  $region1: #{tpu_custom_call.1} parent=0
    #allocation2 [shape = 'u8[65536]{0}', space=vmem, size = 0x10000, scoped, tag = 'input window, operand 0, single buffered']
    #allocation3 [shape = 's32[1]{0}', space=sflag, size = 0x4, scoped, tag = 'scoped memory for tpu_custom_call.1']
    #allocation4 [shape = 's32[1]{0}', space=sflag, size = 0x4, scoped, tag = 'scoped memory for tpu_custom_call.1']
    #allocation5 [shape = 'u8[65536]{0}', space=vmem, size = 0x10000, scoped, tag = 'input window, operand 1, single buffered']
    #allocation6 [shape = 's32[1]{0}', space=sflag, size = 0x4, scoped, tag = 'scoped memory for tpu_custom_call.1']
    #allocation7 [shape = 'u8[65536]{0}', space=vmem, size = 0x10000, scoped, tag = 'input window, operand 2, single buffered']
    #allocation8 [shape = 'u8[65536]{0}', space=vmem, size = 0x10000, scoped, tag = 'input window, operand 4, single buffered']
    #allocation9 [shape = 's32[1]{0}', space=sflag, size = 0x4, scoped, tag = 'scoped memory for tpu_custom_call.1']
    #allocation10 [shape = 'u8[65536]{0}', space=vmem, size = 0x10000, scoped, tag = 'input window, operand 6, single buffered']
    #allocation11 [shape = 'u8[65536]{0}', space=vmem, size = 0x10000, scoped, tag = 'output window, operand 0, single buffered']
    #allocation12 [shape = 'u8[65536]{0}', space=vmem, size = 0x10000, scoped, tag = 'output window, operand 1, single buffered']
    #allocation13 [shape = 's32[1]{0}', space=sflag, size = 0x4, scoped, tag = 'scoped memory for tpu_custom_call.1']
    %14 = vsyncpa [#allocation3], 0
    %15 = vsyncpa [#allocation6], 0
    %16 = vsyncpa [#allocation9], 0
    %17 = vsyncpa [#allocation4], 0
    %18 = vsyncpa [#allocation13], 0
    // Predicated region
    $region2: #{tpu_custom_call.1} parent=1 // pred_check
      _
    $region3: #{tpu_custom_call.1} parent=1 // pred_check_branch
      %20 = sbr.rel (0) target = $region5
    $region4: #{tpu_custom_call.1} parent=1 // pred_region
      %s22 = ssub.s32 2048, 2048
      %23 = vsyncadd [#allocation3], %s22
      %s24 = sshll.u32 [#allocation2], 4
      %s25 = int_to_ptr.vmem [resolvable:$true] %s24
      %30 = dma.hbm_to_vmem [thread:$0]  %s0, 2048, %s25, [#allocation3], 128, 128, 8
    $region5: #{tpu_custom_call.1} parent=1 // pred_fallthru
      _
    // Predicated region
    $region6: #{tpu_custom_call.1} parent=1 // pred_check
      _
    $region7: #{tpu_custom_call.1} parent=1 // pred_check_branch
      %32 = sbr.rel (0) target = $region9
    $region8: #{tpu_custom_call.1} parent=1 // pred_region
      %s34 = ssub.s32 2048, 2048
      %35 = vsyncadd [#allocation6], %s34
      %s36 = sshll.u32 [#allocation5], 4
      %s37 = int_to_ptr.vmem [resolvable:$true] %s36
      %42 = dma.hbm_to_vmem [thread:$0]  %s1, 2048, %s37, [#allocation6], 128, 128, 8
    $region9: #{tpu_custom_call.1} parent=1 // pred_fallthru
      _
    // Predicated region
    $region10: #{tpu_custom_call.1} parent=1 // pred_check
      _
    $region11: #{tpu_custom_call.1} parent=1 // pred_check_branch
      %44 = sbr.rel (0) target = $region13
    $region12: #{tpu_custom_call.1} parent=1 // pred_region
      %s46 = ssub.s32 2048, 2048
      %47 = vsyncadd [#allocation6], %s46
      %s48 = sshll.u32 [#allocation7], 4
      %s49 = int_to_ptr.vmem [resolvable:$true] %s48
      %54 = dma.hbm_to_vmem [thread:$0]  %s2, 2048, %s49, [#allocation6], 128, 128, 8
    $region13: #{tpu_custom_call.1} parent=1 // pred_fallthru
      _
    // Predicated region
    $region14: #{tpu_custom_call.1} parent=1 // pred_check
      _
    $region15: #{tpu_custom_call.1} parent=1 // pred_check_branch
      %56 = sbr.rel (0) target = $region17
    $region16: #{tpu_custom_call.1} parent=1 // pred_region
      _
    $region17: #{tpu_custom_call.1} parent=1 // pred_fallthru
      _
    // Predicated region
    $region18: #{tpu_custom_call.1} parent=1 // pred_check
      _
    $region19: #{tpu_custom_call.1} parent=1 // pred_check_branch
      %58 = sbr.rel (0) target = $region21
    $region20: #{tpu_custom_call.1} parent=1 // pred_region
      %s60 = ssub.s32 2048, 2048
      %61 = vsyncadd [#allocation9], %s60
      %s62 = sshll.u32 [#allocation8], 4
      %s63 = int_to_ptr.vmem [resolvable:$true] %s62
      %68 = dma.hbm_to_vmem [thread:$0]  %s4, 2048, %s63, [#allocation9], 128, 128, 8
    $region21: #{tpu_custom_call.1} parent=1 // pred_fallthru
      _
    // Predicated region
    $region22: #{tpu_custom_call.1} parent=1 // pred_check
      _
    $region23: #{tpu_custom_call.1} parent=1 // pred_check_branch
      %70 = sbr.rel (0) target = $region25
    $region24: #{tpu_custom_call.1} parent=1 // pred_region
      _
    $region25: #{tpu_custom_call.1} parent=1 // pred_fallthru
      _
    // Predicated region
    $region26: #{tpu_custom_call.1} parent=1 // pred_check
      _
    $region27: #{tpu_custom_call.1} parent=1 // pred_check_branch
      %72 = sbr.rel (0) target = $region29
    $region28: #{tpu_custom_call.1} parent=1 // pred_region
      %s74 = ssub.s32 2048, 2048
      %75 = vsyncadd [#allocation9], %s74
      %s76 = sshll.u32 [#allocation10], 4
      %s77 = int_to_ptr.vmem [resolvable:$true] %s76
      %82 = dma.hbm_to_vmem [thread:$0]  %s6, 2048, %s77, [#allocation9], 128, 128, 8
    $region29: #{tpu_custom_call.1} parent=1 // pred_fallthru
      _
    // Predicated region
    $region30: #{tpu_custom_call.1} parent=1 // pred_check
      _
    $region31: #{tpu_custom_call.1} parent=1 // pred_check_branch
      %84 = sbr.rel (0) target = $region33
    $region32: #{tpu_custom_call.1} parent=1 // pred_region
      %85 = dma.done [#allocation3], 2048
    $region33: #{tpu_custom_call.1} parent=1 // pred_fallthru
      _
    // Predicated region
    $region34: #{tpu_custom_call.1} parent=1 // pred_check
      _
    $region35: #{tpu_custom_call.1} parent=1 // pred_check_branch
      %87 = sbr.rel (0) target = $region37
    $region36: #{tpu_custom_call.1} parent=1 // pred_region
      %88 = dma.done [#allocation6], 2048
    $region37: #{tpu_custom_call.1} parent=1 // pred_fallthru
      _
    // Predicated region
    $region38: #{tpu_custom_call.1} parent=1 // pred_check
      _
    $region39: #{tpu_custom_call.1} parent=1 // pred_check_branch
      %90 = sbr.rel (0) target = $region41
    $region40: #{tpu_custom_call.1} parent=1 // pred_region
      %91 = dma.done [#allocation6], 2048
    $region41: #{tpu_custom_call.1} parent=1 // pred_fallthru
      _
    // Predicated region
    $region42: #{tpu_custom_call.1} parent=1 // pred_check
      _
    $region43: #{tpu_custom_call.1} parent=1 // pred_check_branch
      %93 = sbr.rel (0) target = $region45
    $region44: #{tpu_custom_call.1} parent=1 // pred_region
      %94 = dma.done [#allocation9], 2048
    $region45: #{tpu_custom_call.1} parent=1 // pred_fallthru
      _
    // Predicated region
    $region46: #{tpu_custom_call.1} parent=1 // pred_check
      _
    $region47: #{tpu_custom_call.1} parent=1 // pred_check_branch
      %96 = sbr.rel (0) target = $region49
    $region48: #{tpu_custom_call.1} parent=1 // pred_region
      %97 = dma.done [#allocation9], 2048
    $region49: #{tpu_custom_call.1} parent=1 // pred_fallthru
      _
    %v98 = vld [vmem:[#allocation2] sm:$0xff]
    %v99 = vld [vmem:[#allocation2 + $0x8] sm:$0xff]
    %v100 = vld [vmem:[#allocation2 + $0x10] sm:$0xff]
    %v101 = vld [vmem:[#allocation2 + $0x18] sm:$0xff]
    %v102 = vld [vmem:[#allocation2 + $0x20] sm:$0xff]
    %v103 = vld [vmem:[#allocation2 + $0x28] sm:$0xff]
    %v104 = vld [vmem:[#allocation2 + $0x30] sm:$0xff]
    %v105 = vld [vmem:[#allocation2 + $0x38] sm:$0xff]
    %v106 = vld [vmem:[#allocation2 + $0x40] sm:$0xff]
    %v107 = vld [vmem:[#allocation2 + $0x48] sm:$0xff]
    %v108 = vld [vmem:[#allocation2 + $0x50] sm:$0xff]
    %v109 = vld [vmem:[#allocation2 + $0x58] sm:$0xff]
    %v110 = vld [vmem:[#allocation2 + $0x60] sm:$0xff]
    %v111 = vld [vmem:[#allocation2 + $0x68] sm:$0xff]
    %v112 = vld [vmem:[#allocation2 + $0x70] sm:$0xff]
    %v113 = vld [vmem:[#allocation2 + $0x78] sm:$0xff]
    %v114 = vld [vmem:[#allocation5] sm:$0xff]
    %v115 = vld [vmem:[#allocation5 + $0x8] sm:$0xff]
    %v116 = vld [vmem:[#allocation5 + $0x10] sm:$0xff]
    %v117 = vld [vmem:[#allocation5 + $0x18] sm:$0xff]
    %v118 = vld [vmem:[#allocation5 + $0x20] sm:$0xff]
    %v119 = vld [vmem:[#allocation5 + $0x28] sm:$0xff]
    %v120 = vld [vmem:[#allocation5 + $0x30] sm:$0xff]
    %v121 = vld [vmem:[#allocation5 + $0x38] sm:$0xff]
    %v122 = vld [vmem:[#allocation5 + $0x40] sm:$0xff]
    %v123 = vld [vmem:[#allocation5 + $0x48] sm:$0xff]
    %v124 = vld [vmem:[#allocation5 + $0x50] sm:$0xff]
    %v125 = vld [vmem:[#allocation5 + $0x58] sm:$0xff]
    %v126 = vld [vmem:[#allocation5 + $0x60] sm:$0xff]
    %v127 = vld [vmem:[#allocation5 + $0x68] sm:$0xff]
    %v128 = vld [vmem:[#allocation5 + $0x70] sm:$0xff]
    %v129 = vld [vmem:[#allocation5 + $0x78] sm:$0xff]
    %v130 = vld [vmem:[#allocation7] sm:$0xff]
    %v131 = vld [vmem:[#allocation7 + $0x8] sm:$0xff]
    %v132 = vld [vmem:[#allocation7 + $0x10] sm:$0xff]
    %v133 = vld [vmem:[#allocation7 + $0x18] sm:$0xff]
    %v134 = vld [vmem:[#allocation7 + $0x20] sm:$0xff]
    %v135 = vld [vmem:[#allocation7 + $0x28] sm:$0xff]
    %v136 = vld [vmem:[#allocation7 + $0x30] sm:$0xff]
    %v137 = vld [vmem:[#allocation7 + $0x38] sm:$0xff]
    %v138 = vld [vmem:[#allocation7 + $0x40] sm:$0xff]
    %v139 = vld [vmem:[#allocation7 + $0x48] sm:$0xff]
    %v140 = vld [vmem:[#allocation7 + $0x50] sm:$0xff]
    %v141 = vld [vmem:[#allocation7 + $0x58] sm:$0xff]
    %v142 = vld [vmem:[#allocation7 + $0x60] sm:$0xff]
    %v143 = vld [vmem:[#allocation7 + $0x68] sm:$0xff]
    %v144 = vld [vmem:[#allocation7 + $0x70] sm:$0xff]
    %v145 = vld [vmem:[#allocation7 + $0x78] sm:$0xff]
    %v146 = vld [vmem:[#allocation8] sm:$0xff]
    %v147 = vld [vmem:[#allocation8 + $0x8] sm:$0xff]
    %v148 = vld [vmem:[#allocation8 + $0x10] sm:$0xff]
    %v149 = vld [vmem:[#allocation8 + $0x18] sm:$0xff]
    %v150 = vld [vmem:[#allocation8 + $0x20] sm:$0xff]
    %v151 = vld [vmem:[#allocation8 + $0x28] sm:$0xff]
    %v152 = vld [vmem:[#allocation8 + $0x30] sm:$0xff]
    %v153 = vld [vmem:[#allocation8 + $0x38] sm:$0xff]
    %v154 = vld [vmem:[#allocation8 + $0x40] sm:$0xff]
    %v155 = vld [vmem:[#allocation8 + $0x48] sm:$0xff]
    %v156 = vld [vmem:[#allocation8 + $0x50] sm:$0xff]
    %v157 = vld [vmem:[#allocation8 + $0x58] sm:$0xff]
    %v158 = vld [vmem:[#allocation8 + $0x60] sm:$0xff]
    %v159 = vld [vmem:[#allocation8 + $0x68] sm:$0xff]
    %v160 = vld [vmem:[#allocation8 + $0x70] sm:$0xff]
    %v161 = vld [vmem:[#allocation8 + $0x78] sm:$0xff]
    %v162 = vld [vmem:[%s3] sm:$0x1]
    %v163 = vld [vmem:[%s5] sm:$0x1]
    %v165 = vlaneseq
    %v166 = vshrl.u32 %v165, 7
    %v167 = vsub.s32 0, %v166
    %v168 = vrot.slane %v162, %v167
    %170 = vmatprep.subr.mxu0 0.0
    %171 = vmatpush1.msra.mxu0 %v130
    %172 = vmatprep.subr.mxu0 0.0
    %173 = vmatpush1.msra.mxu0 %v131
    %174 = vmatprep.subr.mxu0 0.0
    %175 = vmatpush1.msra.mxu0 %v132
    %176 = vmatprep.subr.mxu0 0.0
    %177 = vmatpush1.msra.mxu0 %v133
    %178 = vmatprep.subr.mxu0 0.0
    %179 = vmatpush1.msra.mxu0 %v134
    %180 = vmatprep.subr.mxu0 0.0
    %181 = vmatpush1.msra.mxu0 %v135
    %182 = vmatprep.subr.mxu0 0.0
    %183 = vmatpush1.msra.mxu0 %v136
    %184 = vmatprep.subr.mxu0 0.0
    %185 = vmatpush1.msra.mxu0 %v137
    %186 = vmatprep.subr.mxu0 0.0
    %187 = vmatpush1.msra.mxu0 %v138
    %188 = vmatprep.subr.mxu0 0.0
    %189 = vmatpush1.msra.mxu0 %v139
    %190 = vmatprep.subr.mxu0 0.0
    %191 = vmatpush1.msra.mxu0 %v140
    %192 = vmatprep.subr.mxu0 0.0
    %193 = vmatpush1.msra.mxu0 %v141
    %194 = vmatprep.subr.mxu0 0.0
    %195 = vmatpush1.msra.mxu0 %v142
    %196 = vmatprep.subr.mxu0 0.0
    %197 = vmatpush1.msra.mxu0 %v143
    %198 = vmatprep.subr.mxu0 0.0
    %199 = vmatpush1.msra.mxu0 %v144
    %200 = vmatprep.subr.mxu0 0.0
    %201 = vmatpush1.msra.mxu0 %v145
    %202 = vmatprep.subr.mxu0 0.0
    %203 = vmatpush1.msra.mxu0 0.0
    %204 = vmatprep.subr.mxu0 0.0
    %205 = vmatpush1.msra.mxu0 0.0
    %206 = vmatprep.subr.mxu0 0.0
    %207 = vmatpush1.msra.mxu0 0.0
    %208 = vmatprep.subr.mxu0 0.0
    %209 = vmatpush1.msra.mxu0 0.0
    %210 = vmatprep.subr.mxu0 0.0
    %211 = vmatpush1.msra.mxu0 0.0
    %212 = vmatprep.subr.mxu0 0.0
    %213 = vmatpush1.msra.mxu0 0.0
    %214 = vmatprep.subr.mxu0 0.0
    %215 = vmatpush1.msra.mxu0 0.0
    %216 = vmatprep.subr.mxu0 0.0
    %217 = vmatpush1.msra.mxu0 0.0
    %218 = vmatprep.subr.mxu0 0.0
    %219 = vmatpush1.msra.mxu0 0.0
    %220 = vmatprep.subr.mxu0 0.0
    %221 = vmatpush1.msra.mxu0 0.0
    %222 = vmatprep.subr.mxu0 0.0
    %223 = vmatpush1.msra.mxu0 0.0
    %224 = vmatprep.subr.mxu0 0.0
    %225 = vmatpush1.msra.mxu0 0.0
    %226 = vmatprep.subr.mxu0 0.0
    %227 = vmatpush1.msra.mxu0 0.0
    %228 = vmatprep.subr.mxu0 0.0
    %229 = vmatpush1.msra.mxu0 0.0
    %230 = vmatprep.subr.mxu0 0.0
    %231 = vmatpush1.msra.mxu0 0.0
    %232 = vmatprep.subr.mxu0 0.0
    %233 = vmatpush1.msra.mxu0 0.0
    %234 = vmatprep.mubr.f32.mxu0 0.0
    %235 = vmatmul.mubr.f32.gmra.mrb[0].mxu0 %v98
    %v236 = vpop.f32.mrb[0].mxu0
    %v237 = vadd.f32 %v168, %v236
    %v238 = vpop.f32.mrb[0].mxu0
    %239 = vmatprep.mubr.f32.mxu0 0.0
    %240 = vmatmul.mubr.f32.gmra.mrb[0].mxu0 %v99
    %v241 = vpop.f32.mrb[0].mxu0
    %v242 = vadd.f32 %v168, %v241
    %v243 = vpop.f32.mrb[0].mxu0
    %244 = vmatprep.mubr.f32.mxu0 0.0
    %245 = vmatmul.mubr.f32.gmra.mrb[0].mxu0 %v100
    %v246 = vpop.f32.mrb[0].mxu0
    %v247 = vadd.f32 %v168, %v246
    %v248 = vpop.f32.mrb[0].mxu0
    %249 = vmatprep.mubr.f32.mxu0 0.0
    %250 = vmatmul.mubr.f32.gmra.mrb[0].mxu0 %v101
    %v251 = vpop.f32.mrb[0].mxu0
    %v252 = vadd.f32 %v168, %v251
    %v253 = vpop.f32.mrb[0].mxu0
    %254 = vmatprep.mubr.f32.mxu0 0.0
    %255 = vmatmul.mubr.f32.gmra.mrb[0].mxu0 %v102
    %v256 = vpop.f32.mrb[0].mxu0
    %v257 = vadd.f32 %v168, %v256
    %v258 = vpop.f32.mrb[0].mxu0
    %259 = vmatprep.mubr.f32.mxu0 0.0
    %260 = vmatmul.mubr.f32.gmra.mrb[0].mxu0 %v103
    %v261 = vpop.f32.mrb[0].mxu0
    %v262 = vadd.f32 %v168, %v261
    %v263 = vpop.f32.mrb[0].mxu0
    %264 = vmatprep.mubr.f32.mxu0 0.0
    %265 = vmatmul.mubr.f32.gmra.mrb[0].mxu0 %v104
    %v266 = vpop.f32.mrb[0].mxu0
    %v267 = vadd.f32 %v168, %v266
    %v268 = vpop.f32.mrb[0].mxu0
    %269 = vmatprep.mubr.f32.mxu0 0.0
    %270 = vmatmul.mubr.f32.gmra.mrb[0].mxu0 %v105
    %v271 = vpop.f32.mrb[0].mxu0
    %v272 = vadd.f32 %v168, %v271
    %v273 = vpop.f32.mrb[0].mxu0
    %274 = vmatprep.mubr.f32.mxu0 0.0
    %275 = vmatmul.mubr.f32.gmra.mrb[0].mxu0 %v106
    %v276 = vpop.f32.mrb[0].mxu0
    %v277 = vadd.f32 %v168, %v276
    %v278 = vpop.f32.mrb[0].mxu0
    %279 = vmatprep.mubr.f32.mxu0 0.0
    %280 = vmatmul.mubr.f32.gmra.mrb[0].mxu0 %v107
    %v281 = vpop.f32.mrb[0].mxu0
    %v282 = vadd.f32 %v168, %v281
    %v283 = vpop.f32.mrb[0].mxu0
    %284 = vmatprep.mubr.f32.mxu0 0.0
    %285 = vmatmul.mubr.f32.gmra.mrb[0].mxu0 %v108
    %v286 = vpop.f32.mrb[0].mxu0
    %v287 = vadd.f32 %v168, %v286
    %v288 = vpop.f32.mrb[0].mxu0
    %289 = vmatprep.mubr.f32.mxu0 0.0
    %290 = vmatmul.mubr.f32.gmra.mrb[0].mxu0 %v109
    %v291 = vpop.f32.mrb[0].mxu0
    %v292 = vadd.f32 %v168, %v291
    %v293 = vpop.f32.mrb[0].mxu0
    %294 = vmatprep.mubr.f32.mxu0 0.0
    %295 = vmatmul.mubr.f32.gmra.mrb[0].mxu0 %v110
    %v296 = vpop.f32.mrb[0].mxu0
    %v297 = vadd.f32 %v168, %v296
    %v298 = vpop.f32.mrb[0].mxu0
    %299 = vmatprep.mubr.f32.mxu0 0.0
    %300 = vmatmul.mubr.f32.gmra.mrb[0].mxu0 %v111
    %v301 = vpop.f32.mrb[0].mxu0
    %v302 = vadd.f32 %v168, %v301
    %v303 = vpop.f32.mrb[0].mxu0
    %304 = vmatprep.mubr.f32.mxu0 0.0
    %305 = vmatmul.mubr.f32.gmra.mrb[0].mxu0 %v112
    %v306 = vpop.f32.mrb[0].mxu0
    %v307 = vadd.f32 %v168, %v306
    %v308 = vpop.f32.mrb[0].mxu0
    %309 = vmatprep.mubr.f32.mxu0 0.0
    %310 = vmatmul.mubr.f32.gmra.mrb[0].mxu0 %v113
    %v311 = vpop.f32.mrb[0].mxu0
    %v312 = vadd.f32 %v168, %v311
    %v313 = vpop.f32.mrb[0].mxu0
    %314 = vdwg.mxu0
    %v315 = vmul.f32 %v237, 3.0
    %v316 = vmul.f32 %v242, 3.0
    %v317 = vmul.f32 %v247, 3.0
    %v318 = vmul.f32 %v252, 3.0
    %v319 = vmul.f32 %v257, 3.0
    %v320 = vmul.f32 %v262, 3.0
    %v321 = vmul.f32 %v267, 3.0
    %v322 = vmul.f32 %v272, 3.0
    %v323 = vmul.f32 %v277, 3.0
    %v324 = vmul.f32 %v282, 3.0
    %v325 = vmul.f32 %v287, 3.0
    %v326 = vmul.f32 %v292, 3.0
    %v327 = vmul.f32 %v297, 3.0
    %v328 = vmul.f32 %v302, 3.0
    %v329 = vmul.f32 %v307, 3.0
    %v330 = vmul.f32 %v312, 3.0
    %v331 = vtanh.pop %v315
    %v332 = vtanh.pop %v316
    %v333 = vtanh.pop %v317
    %v334 = vtanh.pop %v318
    %v335 = vtanh.pop %v319
    %v336 = vtanh.pop %v320
    %v337 = vtanh.pop %v321
    %v338 = vtanh.pop %v322
    %v339 = vtanh.pop %v323
    %v340 = vtanh.pop %v324
    %v341 = vtanh.pop %v325
    %v342 = vtanh.pop %v326
    %v343 = vtanh.pop %v327
    %v344 = vtanh.pop %v328
    %v345 = vtanh.pop %v329
    %v346 = vtanh.pop %v330
    %v348 = vlaneseq
    %v349 = vshrl.u32 %v348, 7
    %v350 = vsub.s32 0, %v349
    %v351 = vrot.slane %v163, %v350
    %353 = vmatprep.subr.mxu0 0.0
    %354 = vmatpush1.msra.mxu0 %v146
    %355 = vmatprep.subr.mxu0 0.0
    %356 = vmatpush1.msra.mxu0 %v147
    %357 = vmatprep.subr.mxu0 0.0
    %358 = vmatpush1.msra.mxu0 %v148
    %359 = vmatprep.subr.mxu0 0.0
    %360 = vmatpush1.msra.mxu0 %v149
    %361 = vmatprep.subr.mxu0 0.0
    %362 = vmatpush1.msra.mxu0 %v150
    %363 = vmatprep.subr.mxu0 0.0
    %364 = vmatpush1.msra.mxu0 %v151
    %365 = vmatprep.subr.mxu0 0.0
    %366 = vmatpush1.msra.mxu0 %v152
    %367 = vmatprep.subr.mxu0 0.0
    %368 = vmatpush1.msra.mxu0 %v153
    %369 = vmatprep.subr.mxu0 0.0
    %370 = vmatpush1.msra.mxu0 %v154
    %371 = vmatprep.subr.mxu0 0.0
    %372 = vmatpush1.msra.mxu0 %v155
    %373 = vmatprep.subr.mxu0 0.0
    %374 = vmatpush1.msra.mxu0 %v156
    %375 = vmatprep.subr.mxu0 0.0
    %376 = vmatpush1.msra.mxu0 %v157
    %377 = vmatprep.subr.mxu0 0.0
    %378 = vmatpush1.msra.mxu0 %v158
    %379 = vmatprep.subr.mxu0 0.0
    %380 = vmatpush1.msra.mxu0 %v159
    %381 = vmatprep.subr.mxu0 0.0
    %382 = vmatpush1.msra.mxu0 %v160
    %383 = vmatprep.subr.mxu0 0.0
    %384 = vmatpush1.msra.mxu0 %v161
    %385 = vmatprep.subr.mxu0 0.0
    %386 = vmatpush1.msra.mxu0 0.0
    %387 = vmatprep.subr.mxu0 0.0
    %388 = vmatpush1.msra.mxu0 0.0
    %389 = vmatprep.subr.mxu0 0.0
    %390 = vmatpush1.msra.mxu0 0.0
    %391 = vmatprep.subr.mxu0 0.0
    %392 = vmatpush1.msra.mxu0 0.0
    %393 = vmatprep.subr.mxu0 0.0
    %394 = vmatpush1.msra.mxu0 0.0
    %395 = vmatprep.subr.mxu0 0.0
    %396 = vmatpush1.msra.mxu0 0.0
    %397 = vmatprep.subr.mxu0 0.0
    %398 = vmatpush1.msra.mxu0 0.0
    %399 = vmatprep.subr.mxu0 0.0
    %400 = vmatpush1.msra.mxu0 0.0
    %401 = vmatprep.subr.mxu0 0.0
    %402 = vmatpush1.msra.mxu0 0.0
    %403 = vmatprep.subr.mxu0 0.0
    %404 = vmatpush1.msra.mxu0 0.0
    %405 = vmatprep.subr.mxu0 0.0
    %406 = vmatpush1.msra.mxu0 0.0
    %407 = vmatprep.subr.mxu0 0.0
    %408 = vmatpush1.msra.mxu0 0.0
    %409 = vmatprep.subr.mxu0 0.0
    %410 = vmatpush1.msra.mxu0 0.0
    %411 = vmatprep.subr.mxu0 0.0
    %412 = vmatpush1.msra.mxu0 0.0
    %413 = vmatprep.subr.mxu0 0.0
    %414 = vmatpush1.msra.mxu0 0.0
    %415 = vmatprep.subr.mxu0 0.0
    %416 = vmatpush1.msra.mxu0 0.0
    %417 = vmatprep.mubr.f32.mxu0 0.0
    %418 = vmatmul.mubr.f32.gmra.mrb[0].mxu0 %v114
    %v419 = vpop.f32.mrb[0].mxu0
    %v420 = vadd.f32 %v351, %v419
    %v421 = vpop.f32.mrb[0].mxu0
    %422 = vmatprep.mubr.f32.mxu0 0.0
    %423 = vmatmul.mubr.f32.gmra.mrb[0].mxu0 %v115
    %v424 = vpop.f32.mrb[0].mxu0
    %v425 = vadd.f32 %v351, %v424
    %v426 = vpop.f32.mrb[0].mxu0
    %427 = vmatprep.mubr.f32.mxu0 0.0
    %428 = vmatmul.mubr.f32.gmra.mrb[0].mxu0 %v116
    %v429 = vpop.f32.mrb[0].mxu0
    %v430 = vadd.f32 %v351, %v429
    %v431 = vpop.f32.mrb[0].mxu0
    %432 = vmatprep.mubr.f32.mxu0 0.0
    %433 = vmatmul.mubr.f32.gmra.mrb[0].mxu0 %v117
    %v434 = vpop.f32.mrb[0].mxu0
    %v435 = vadd.f32 %v351, %v434
    %v436 = vpop.f32.mrb[0].mxu0
    %437 = vmatprep.mubr.f32.mxu0 0.0
    %438 = vmatmul.mubr.f32.gmra.mrb[0].mxu0 %v118
    %v439 = vpop.f32.mrb[0].mxu0
    %v440 = vadd.f32 %v351, %v439
    %v441 = vpop.f32.mrb[0].mxu0
    %442 = vmatprep.mubr.f32.mxu0 0.0
    %443 = vmatmul.mubr.f32.gmra.mrb[0].mxu0 %v119
    %v444 = vpop.f32.mrb[0].mxu0
    %v445 = vadd.f32 %v351, %v444
    %v446 = vpop.f32.mrb[0].mxu0
    %447 = vmatprep.mubr.f32.mxu0 0.0
    %448 = vmatmul.mubr.f32.gmra.mrb[0].mxu0 %v120
    %v449 = vpop.f32.mrb[0].mxu0
    %v450 = vadd.f32 %v351, %v449
    %v451 = vpop.f32.mrb[0].mxu0
    %452 = vmatprep.mubr.f32.mxu0 0.0
    %453 = vmatmul.mubr.f32.gmra.mrb[0].mxu0 %v121
    %v454 = vpop.f32.mrb[0].mxu0
    %v455 = vadd.f32 %v351, %v454
    %v456 = vpop.f32.mrb[0].mxu0
    %457 = vmatprep.mubr.f32.mxu0 0.0
    %458 = vmatmul.mubr.f32.gmra.mrb[0].mxu0 %v122
    %v459 = vpop.f32.mrb[0].mxu0
    %v460 = vadd.f32 %v351, %v459
    %v461 = vpop.f32.mrb[0].mxu0
    %462 = vmatprep.mubr.f32.mxu0 0.0
    %463 = vmatmul.mubr.f32.gmra.mrb[0].mxu0 %v123
    %v464 = vpop.f32.mrb[0].mxu0
    %v465 = vadd.f32 %v351, %v464
    %v466 = vpop.f32.mrb[0].mxu0
    %467 = vmatprep.mubr.f32.mxu0 0.0
    %468 = vmatmul.mubr.f32.gmra.mrb[0].mxu0 %v124
    %v469 = vpop.f32.mrb[0].mxu0
    %v470 = vadd.f32 %v351, %v469
    %v471 = vpop.f32.mrb[0].mxu0
    %472 = vmatprep.mubr.f32.mxu0 0.0
    %473 = vmatmul.mubr.f32.gmra.mrb[0].mxu0 %v125
    %v474 = vpop.f32.mrb[0].mxu0
    %v475 = vadd.f32 %v351, %v474
    %v476 = vpop.f32.mrb[0].mxu0
    %477 = vmatprep.mubr.f32.mxu0 0.0
    %478 = vmatmul.mubr.f32.gmra.mrb[0].mxu0 %v126
    %v479 = vpop.f32.mrb[0].mxu0
    %v480 = vadd.f32 %v351, %v479
    %v481 = vpop.f32.mrb[0].mxu0
    %482 = vmatprep.mubr.f32.mxu0 0.0
    %483 = vmatmul.mubr.f32.gmra.mrb[0].mxu0 %v127
    %v484 = vpop.f32.mrb[0].mxu0
    %v485 = vadd.f32 %v351, %v484
    %v486 = vpop.f32.mrb[0].mxu0
    %487 = vmatprep.mubr.f32.mxu0 0.0
    %488 = vmatmul.mubr.f32.gmra.mrb[0].mxu0 %v128
    %v489 = vpop.f32.mrb[0].mxu0
    %v490 = vadd.f32 %v351, %v489
    %v491 = vpop.f32.mrb[0].mxu0
    %492 = vmatprep.mubr.f32.mxu0 0.0
    %493 = vmatmul.mubr.f32.gmra.mrb[0].mxu0 %v129
    %v494 = vpop.f32.mrb[0].mxu0
    %v495 = vadd.f32 %v351, %v494
    %v496 = vpop.f32.mrb[0].mxu0
    %497 = vdwg.mxu0
    %v498 = vmul.f32 %v420, 3.0
    %v499 = vmul.f32 %v425, 3.0
    %v500 = vmul.f32 %v430, 3.0
    %v501 = vmul.f32 %v435, 3.0
    %v502 = vmul.f32 %v440, 3.0
    %v503 = vmul.f32 %v445, 3.0
    %v504 = vmul.f32 %v450, 3.0
    %v505 = vmul.f32 %v455, 3.0
    %v506 = vmul.f32 %v460, 3.0
    %v507 = vmul.f32 %v465, 3.0
    %v508 = vmul.f32 %v470, 3.0
    %v509 = vmul.f32 %v475, 3.0
    %v510 = vmul.f32 %v480, 3.0
    %v511 = vmul.f32 %v485, 3.0
    %v512 = vmul.f32 %v490, 3.0
    %v513 = vmul.f32 %v495, 3.0
    %v514 = vtanh.pop %v498
    %v515 = vtanh.pop %v499
    %v516 = vtanh.pop %v500
    %v517 = vtanh.pop %v501
    %v518 = vtanh.pop %v502
    %v519 = vtanh.pop %v503
    %v520 = vtanh.pop %v504
    %v521 = vtanh.pop %v505
    %v522 = vtanh.pop %v506
    %v523 = vtanh.pop %v507
    %v524 = vtanh.pop %v508
    %v525 = vtanh.pop %v509
    %v526 = vtanh.pop %v510
    %v527 = vtanh.pop %v511
    %v528 = vtanh.pop %v512
    %v529 = vtanh.pop %v513
    %530 = vmatprep.subr.mxu0 0.0
    %531 = vmatpush1.xpose.msra.mxu0 %v514
    %532 = vmatprep.subr.mxu0 0.0
    %533 = vmatpush1.xpose.msra.mxu0 %v515
    %534 = vmatprep.subr.mxu0 0.0
    %535 = vmatpush1.xpose.msra.mxu0 %v516
    %536 = vmatprep.subr.mxu0 0.0
    %537 = vmatpush1.xpose.msra.mxu0 %v517
    %538 = vmatprep.subr.mxu0 0.0
    %539 = vmatpush1.xpose.msra.mxu0 %v518
    %540 = vmatprep.subr.mxu0 0.0
    %541 = vmatpush1.xpose.msra.mxu0 %v519
    %542 = vmatprep.subr.mxu0 0.0
    %543 = vmatpush1.xpose.msra.mxu0 %v520
    %544 = vmatprep.subr.mxu0 0.0
    %545 = vmatpush1.xpose.msra.mxu0 %v521
    %546 = vmatprep.subr.mxu0 0.0
    %547 = vmatpush1.xpose.msra.mxu0 %v522
    %548 = vmatprep.subr.mxu0 0.0
    %549 = vmatpush1.xpose.msra.mxu0 %v523
    %550 = vmatprep.subr.mxu0 0.0
    %551 = vmatpush1.xpose.msra.mxu0 %v524
    %552 = vmatprep.subr.mxu0 0.0
    %553 = vmatpush1.xpose.msra.mxu0 %v525
    %554 = vmatprep.subr.mxu0 0.0
    %555 = vmatpush1.xpose.msra.mxu0 %v526
    %556 = vmatprep.subr.mxu0 0.0
    %557 = vmatpush1.xpose.msra.mxu0 %v527
    %558 = vmatprep.subr.mxu0 0.0
    %559 = vmatpush1.xpose.msra.mxu0 %v528
    %560 = vmatprep.subr.mxu0 0.0
    %561 = vmatpush1.xpose.msra.mxu0 %v529
    %562 = vmatprep.subr.mxu0 0.0
    %563 = vmatpush1.xpose.msra.mxu0 0.0
    %564 = vmatprep.subr.mxu0 0.0
    %565 = vmatpush1.xpose.msra.mxu0 0.0
    %566 = vmatprep.subr.mxu0 0.0
    %567 = vmatpush1.xpose.msra.mxu0 0.0
    %568 = vmatprep.subr.mxu0 0.0
    %569 = vmatpush1.xpose.msra.mxu0 0.0
    %570 = vmatprep.subr.mxu0 0.0
    %571 = vmatpush1.xpose.msra.mxu0 0.0
    %572 = vmatprep.subr.mxu0 0.0
    %573 = vmatpush1.xpose.msra.mxu0 0.0
    %574 = vmatprep.subr.mxu0 0.0
    %575 = vmatpush1.xpose.msra.mxu0 0.0
    %576 = vmatprep.subr.mxu0 0.0
    %577 = vmatpush1.xpose.msra.mxu0 0.0
    %578 = vmatprep.subr.mxu0 0.0
    %579 = vmatpush1.xpose.msra.mxu0 0.0
    %580 = vmatprep.subr.mxu0 0.0
    %581 = vmatpush1.xpose.msra.mxu0 0.0
    %582 = vmatprep.subr.mxu0 0.0
    %583 = vmatpush1.xpose.msra.mxu0 0.0
    %584 = vmatprep.subr.mxu0 0.0
    %585 = vmatpush1.xpose.msra.mxu0 0.0
    %586 = vmatprep.subr.mxu0 0.0
    %587 = vmatpush1.xpose.msra.mxu0 0.0
    %588 = vmatprep.subr.mxu0 0.0
    %589 = vmatpush1.xpose.msra.mxu0 0.0
    %590 = vmatprep.subr.mxu0 0.0
    %591 = vmatpush1.xpose.msra.mxu0 0.0
    %592 = vmatprep.subr.mxu0 0.0
    %593 = vmatpush1.xpose.msra.mxu0 0.0
    %594 = vmatprep.mubr.f32.mxu0 0.0
    %595 = vmatmul.mubr.f32.gmra.mrb[0].mxu0 %v331
    %v596 = vpop.f32.mrb[0].mxu0
    %v597 = vadd.f32 0.0, %v596
    %v598 = vpop.f32.mrb[0].mxu0
    %599 = vmatprep.mubr.f32.mxu0 0.0
    %600 = vmatmul.mubr.f32.gmra.mrb[0].mxu0 %v332
    %v601 = vpop.f32.mrb[0].mxu0
    %v602 = vadd.f32 0.0, %v601
    %v603 = vpop.f32.mrb[0].mxu0
    %604 = vmatprep.mubr.f32.mxu0 0.0
    %605 = vmatmul.mubr.f32.gmra.mrb[0].mxu0 %v333
    %v606 = vpop.f32.mrb[0].mxu0
    %v607 = vadd.f32 0.0, %v606
    %v608 = vpop.f32.mrb[0].mxu0
    %609 = vmatprep.mubr.f32.mxu0 0.0
    %610 = vmatmul.mubr.f32.gmra.mrb[0].mxu0 %v334
    %v611 = vpop.f32.mrb[0].mxu0
    %v612 = vadd.f32 0.0, %v611
    %v613 = vpop.f32.mrb[0].mxu0
    %614 = vmatprep.mubr.f32.mxu0 0.0
    %615 = vmatmul.mubr.f32.gmra.mrb[0].mxu0 %v335
    %v616 = vpop.f32.mrb[0].mxu0
    %v617 = vadd.f32 0.0, %v616
    %v618 = vpop.f32.mrb[0].mxu0
    %619 = vmatprep.mubr.f32.mxu0 0.0
    %620 = vmatmul.mubr.f32.gmra.mrb[0].mxu0 %v336
    %v621 = vpop.f32.mrb[0].mxu0
    %v622 = vadd.f32 0.0, %v621
    %v623 = vpop.f32.mrb[0].mxu0
    %624 = vmatprep.mubr.f32.mxu0 0.0
    %625 = vmatmul.mubr.f32.gmra.mrb[0].mxu0 %v337
    %v626 = vpop.f32.mrb[0].mxu0
    %v627 = vadd.f32 0.0, %v626
    %v628 = vpop.f32.mrb[0].mxu0
    %629 = vmatprep.mubr.f32.mxu0 0.0
    %630 = vmatmul.mubr.f32.gmra.mrb[0].mxu0 %v338
    %v631 = vpop.f32.mrb[0].mxu0
    %v632 = vadd.f32 0.0, %v631
    %v633 = vpop.f32.mrb[0].mxu0
    %634 = vmatprep.mubr.f32.mxu0 0.0
    %635 = vmatmul.mubr.f32.gmra.mrb[0].mxu0 %v339
    %v636 = vpop.f32.mrb[0].mxu0
    %v637 = vadd.f32 0.0, %v636
    %v638 = vpop.f32.mrb[0].mxu0
    %639 = vmatprep.mubr.f32.mxu0 0.0
    %640 = vmatmul.mubr.f32.gmra.mrb[0].mxu0 %v340
    %v641 = vpop.f32.mrb[0].mxu0
    %v642 = vadd.f32 0.0, %v641
    %v643 = vpop.f32.mrb[0].mxu0
    %644 = vmatprep.mubr.f32.mxu0 0.0
    %645 = vmatmul.mubr.f32.gmra.mrb[0].mxu0 %v341
    %v646 = vpop.f32.mrb[0].mxu0
    %v647 = vadd.f32 0.0, %v646
    %v648 = vpop.f32.mrb[0].mxu0
    %649 = vmatprep.mubr.f32.mxu0 0.0
    %650 = vmatmul.mubr.f32.gmra.mrb[0].mxu0 %v342
    %v651 = vpop.f32.mrb[0].mxu0
    %v652 = vadd.f32 0.0, %v651
    %v653 = vpop.f32.mrb[0].mxu0
    %654 = vmatprep.mubr.f32.mxu0 0.0
    %655 = vmatmul.mubr.f32.gmra.mrb[0].mxu0 %v343
    %v656 = vpop.f32.mrb[0].mxu0
    %v657 = vadd.f32 0.0, %v656
    %v658 = vpop.f32.mrb[0].mxu0
    %659 = vmatprep.mubr.f32.mxu0 0.0
    %660 = vmatmul.mubr.f32.gmra.mrb[0].mxu0 %v344
    %v661 = vpop.f32.mrb[0].mxu0
    %v662 = vadd.f32 0.0, %v661
    %v663 = vpop.f32.mrb[0].mxu0
    %664 = vmatprep.mubr.f32.mxu0 0.0
    %665 = vmatmul.mubr.f32.gmra.mrb[0].mxu0 %v345
    %v666 = vpop.f32.mrb[0].mxu0
    %v667 = vadd.f32 0.0, %v666
    %v668 = vpop.f32.mrb[0].mxu0
    %669 = vmatprep.mubr.f32.mxu0 0.0
    %670 = vmatmul.mubr.f32.gmra.mrb[0].mxu0 %v346
    %v671 = vpop.f32.mrb[0].mxu0
    %v672 = vadd.f32 0.0, %v671
    %v673 = vpop.f32.mrb[0].mxu0
    %674 = vdwg.mxu0
    %675 = vmatprep.subr.mxu0 0.0
    %676 = vmatpush1.xpose.msra.mxu0 %v331
    %677 = vmatprep.subr.mxu0 0.0
    %678 = vmatpush1.xpose.msra.mxu0 %v332
    %679 = vmatprep.subr.mxu0 0.0
    %680 = vmatpush1.xpose.msra.mxu0 %v333
    %681 = vmatprep.subr.mxu0 0.0
    %682 = vmatpush1.xpose.msra.mxu0 %v334
    %683 = vmatprep.subr.mxu0 0.0
    %684 = vmatpush1.xpose.msra.mxu0 %v335
    %685 = vmatprep.subr.mxu0 0.0
    %686 = vmatpush1.xpose.msra.mxu0 %v336
    %687 = vmatprep.subr.mxu0 0.0
    %688 = vmatpush1.xpose.msra.mxu0 %v337
    %689 = vmatprep.subr.mxu0 0.0
    %690 = vmatpush1.xpose.msra.mxu0 %v338
    %691 = vmatprep.subr.mxu0 0.0
    %692 = vmatpush1.xpose.msra.mxu0 %v339
    %693 = vmatprep.subr.mxu0 0.0
    %694 = vmatpush1.xpose.msra.mxu0 %v340
    %695 = vmatprep.subr.mxu0 0.0
    %696 = vmatpush1.xpose.msra.mxu0 %v341
    %697 = vmatprep.subr.mxu0 0.0
    %698 = vmatpush1.xpose.msra.mxu0 %v342
    %699 = vmatprep.subr.mxu0 0.0
    %700 = vmatpush1.xpose.msra.mxu0 %v343
    %701 = vmatprep.subr.mxu0 0.0
    %702 = vmatpush1.xpose.msra.mxu0 %v344
    %703 = vmatprep.subr.mxu0 0.0
    %704 = vmatpush1.xpose.msra.mxu0 %v345
    %705 = vmatprep.subr.mxu0 0.0
    %706 = vmatpush1.xpose.msra.mxu0 %v346
    %707 = vmatprep.subr.mxu0 0.0
    %708 = vmatpush1.xpose.msra.mxu0 0.0
    %709 = vmatprep.subr.mxu0 0.0
    %710 = vmatpush1.xpose.msra.mxu0 0.0
    %711 = vmatprep.subr.mxu0 0.0
    %712 = vmatpush1.xpose.msra.mxu0 0.0
    %713 = vmatprep.subr.mxu0 0.0
    %714 = vmatpush1.xpose.msra.mxu0 0.0
    %715 = vmatprep.subr.mxu0 0.0
    %716 = vmatpush1.xpose.msra.mxu0 0.0
    %717 = vmatprep.subr.mxu0 0.0
    %718 = vmatpush1.xpose.msra.mxu0 0.0
    %719 = vmatprep.subr.mxu0 0.0
    %720 = vmatpush1.xpose.msra.mxu0 0.0
    %721 = vmatprep.subr.mxu0 0.0
    %722 = vmatpush1.xpose.msra.mxu0 0.0
    %723 = vmatprep.subr.mxu0 0.0
    %724 = vmatpush1.xpose.msra.mxu0 0.0
    %725 = vmatprep.subr.mxu0 0.0
    %726 = vmatpush1.xpose.msra.mxu0 0.0
    %727 = vmatprep.subr.mxu0 0.0
    %728 = vmatpush1.xpose.msra.mxu0 0.0
    %729 = vmatprep.subr.mxu0 0.0
    %730 = vmatpush1.xpose.msra.mxu0 0.0
    %731 = vmatprep.subr.mxu0 0.0
    %732 = vmatpush1.xpose.msra.mxu0 0.0
    %733 = vmatprep.subr.mxu0 0.0
    %734 = vmatpush1.xpose.msra.mxu0 0.0
    %735 = vmatprep.subr.mxu0 0.0
    %736 = vmatpush1.xpose.msra.mxu0 0.0
    %737 = vmatprep.subr.mxu0 0.0
    %738 = vmatpush1.xpose.msra.mxu0 0.0
    %739 = vmatprep.mubr.f32.mxu0 0.0
    %740 = vmatmul.mubr.f32.gmra.mrb[0].mxu0 %v514
    %v741 = vpop.f32.mrb[0].mxu0
    %v742 = vadd.f32 0.0, %v741
    %v743 = vpop.f32.mrb[0].mxu0
    %744 = vmatprep.mubr.f32.mxu0 0.0
    %745 = vmatmul.mubr.f32.gmra.mrb[0].mxu0 %v515
    %v746 = vpop.f32.mrb[0].mxu0
    %v747 = vadd.f32 0.0, %v746
    %v748 = vpop.f32.mrb[0].mxu0
    %749 = vmatprep.mubr.f32.mxu0 0.0
    %750 = vmatmul.mubr.f32.gmra.mrb[0].mxu0 %v516
    %v751 = vpop.f32.mrb[0].mxu0
    %v752 = vadd.f32 0.0, %v751
    %v753 = vpop.f32.mrb[0].mxu0
    %754 = vmatprep.mubr.f32.mxu0 0.0
    %755 = vmatmul.mubr.f32.gmra.mrb[0].mxu0 %v517
    %v756 = vpop.f32.mrb[0].mxu0
    %v757 = vadd.f32 0.0, %v756
    %v758 = vpop.f32.mrb[0].mxu0
    %759 = vmatprep.mubr.f32.mxu0 0.0
    %760 = vmatmul.mubr.f32.gmra.mrb[0].mxu0 %v518
    %v761 = vpop.f32.mrb[0].mxu0
    %v762 = vadd.f32 0.0, %v761
    %v763 = vpop.f32.mrb[0].mxu0
    %764 = vmatprep.mubr.f32.mxu0 0.0
    %765 = vmatmul.mubr.f32.gmra.mrb[0].mxu0 %v519
    %v766 = vpop.f32.mrb[0].mxu0
    %v767 = vadd.f32 0.0, %v766
    %v768 = vpop.f32.mrb[0].mxu0
    %769 = vmatprep.mubr.f32.mxu0 0.0
    %770 = vmatmul.mubr.f32.gmra.mrb[0].mxu0 %v520
    %v771 = vpop.f32.mrb[0].mxu0
    %v772 = vadd.f32 0.0, %v771
    %v773 = vpop.f32.mrb[0].mxu0
    %774 = vmatprep.mubr.f32.mxu0 0.0
    %775 = vmatmul.mubr.f32.gmra.mrb[0].mxu0 %v521
    %v776 = vpop.f32.mrb[0].mxu0
    %v777 = vadd.f32 0.0, %v776
    %v778 = vpop.f32.mrb[0].mxu0
    %779 = vmatprep.mubr.f32.mxu0 0.0
    %780 = vmatmul.mubr.f32.gmra.mrb[0].mxu0 %v522
    %v781 = vpop.f32.mrb[0].mxu0
    %v782 = vadd.f32 0.0, %v781
    %v783 = vpop.f32.mrb[0].mxu0
    %784 = vmatprep.mubr.f32.mxu0 0.0
    %785 = vmatmul.mubr.f32.gmra.mrb[0].mxu0 %v523
    %v786 = vpop.f32.mrb[0].mxu0
    %v787 = vadd.f32 0.0, %v786
    %v788 = vpop.f32.mrb[0].mxu0
    %789 = vmatprep.mubr.f32.mxu0 0.0
    %790 = vmatmul.mubr.f32.gmra.mrb[0].mxu0 %v524
    %v791 = vpop.f32.mrb[0].mxu0
    %v792 = vadd.f32 0.0, %v791
    %v793 = vpop.f32.mrb[0].mxu0
    %794 = vmatprep.mubr.f32.mxu0 0.0
    %795 = vmatmul.mubr.f32.gmra.mrb[0].mxu0 %v525
    %v796 = vpop.f32.mrb[0].mxu0
    %v797 = vadd.f32 0.0, %v796
    %v798 = vpop.f32.mrb[0].mxu0
    %799 = vmatprep.mubr.f32.mxu0 0.0
    %800 = vmatmul.mubr.f32.gmra.mrb[0].mxu0 %v526
    %v801 = vpop.f32.mrb[0].mxu0
    %v802 = vadd.f32 0.0, %v801
    %v803 = vpop.f32.mrb[0].mxu0
    %804 = vmatprep.mubr.f32.mxu0 0.0
    %805 = vmatmul.mubr.f32.gmra.mrb[0].mxu0 %v527
    %v806 = vpop.f32.mrb[0].mxu0
    %v807 = vadd.f32 0.0, %v806
    %v808 = vpop.f32.mrb[0].mxu0
    %809 = vmatprep.mubr.f32.mxu0 0.0
    %810 = vmatmul.mubr.f32.gmra.mrb[0].mxu0 %v528
    %v811 = vpop.f32.mrb[0].mxu0
    %v812 = vadd.f32 0.0, %v811
    %v813 = vpop.f32.mrb[0].mxu0
    %814 = vmatprep.mubr.f32.mxu0 0.0
    %815 = vmatmul.mubr.f32.gmra.mrb[0].mxu0 %v529
    %v816 = vpop.f32.mrb[0].mxu0
    %v817 = vadd.f32 0.0, %v816
    %v818 = vpop.f32.mrb[0].mxu0
    %819 = vdwg.mxu0
    %v820 = vsub.f32 %v597, %v742
    %v821 = vsub.f32 %v602, %v747
    %v822 = vsub.f32 %v607, %v752
    %v823 = vsub.f32 %v612, %v757
    %v824 = vsub.f32 %v617, %v762
    %v825 = vsub.f32 %v622, %v767
    %v826 = vsub.f32 %v627, %v772
    %v827 = vsub.f32 %v632, %v777
    %v828 = vsub.f32 %v637, %v782
    %v829 = vsub.f32 %v642, %v787
    %v830 = vsub.f32 %v647, %v792
    %v831 = vsub.f32 %v652, %v797
    %v832 = vsub.f32 %v657, %v802
    %v833 = vsub.f32 %v662, %v807
    %v834 = vsub.f32 %v667, %v812
    %v835 = vsub.f32 %v672, %v817
    %v836 = vmul.f32 %v820, 3.0
    %v837 = vmul.f32 %v821, 3.0
    %v838 = vmul.f32 %v822, 3.0
    %v839 = vmul.f32 %v823, 3.0
    %v840 = vmul.f32 %v824, 3.0
    %v841 = vmul.f32 %v825, 3.0
    %v842 = vmul.f32 %v826, 3.0
    %v843 = vmul.f32 %v827, 3.0
    %v844 = vmul.f32 %v828, 3.0
    %v845 = vmul.f32 %v829, 3.0
    %v846 = vmul.f32 %v830, 3.0
    %v847 = vmul.f32 %v831, 3.0
    %v848 = vmul.f32 %v832, 3.0
    %v849 = vmul.f32 %v833, 3.0
    %v850 = vmul.f32 %v834, 3.0
    %v851 = vmul.f32 %v835, 3.0
    %v852 = vtanh.pop %v836
    %v853 = vtanh.pop %v837
    %v854 = vtanh.pop %v838
    %v855 = vtanh.pop %v839
    %v856 = vtanh.pop %v840
    %v857 = vtanh.pop %v841
    %v858 = vtanh.pop %v842
    %v859 = vtanh.pop %v843
    %v860 = vtanh.pop %v844
    %v861 = vtanh.pop %v845
    %v862 = vtanh.pop %v846
    %v863 = vtanh.pop %v847
    %v864 = vtanh.pop %v848
    %v865 = vtanh.pop %v849
    %v866 = vtanh.pop %v850
    %v867 = vtanh.pop %v851
    %v868 = vmax.f32 %v852, 0.0
    %v869 = vmax.f32 %v853, 0.0
    %v870 = vmax.f32 %v854, 0.0
    %v871 = vmax.f32 %v855, 0.0
    %v872 = vmax.f32 %v856, 0.0
    %v873 = vmax.f32 %v857, 0.0
    %v874 = vmax.f32 %v858, 0.0
    %v875 = vmax.f32 %v859, 0.0
    %v876 = vmax.f32 %v860, 0.0
    %v877 = vmax.f32 %v861, 0.0
    %v878 = vmax.f32 %v862, 0.0
    %v879 = vmax.f32 %v863, 0.0
    %v880 = vmax.f32 %v864, 0.0
    %v881 = vmax.f32 %v865, 0.0
    %v882 = vmax.f32 %v866, 0.0
    %v883 = vmax.f32 %v867, 0.0
    %v884 = vlaneseq
    %v885 = vand.u32 %v884, 127
    %vm886 = vcmp.lt.s32.totalorder %v885, 24
    %v887 = vld [vmem:[#allocation10] sm:$0xff]
    %v888 = vld [vmem:[#allocation10 + $0x8] sm:$0xff]
    %v889 = vld [vmem:[#allocation10 + $0x10] sm:$0xff]
    %v890 = vld [vmem:[#allocation10 + $0x18] sm:$0xff]
    %v891 = vld [vmem:[#allocation10 + $0x20] sm:$0xff]
    %v892 = vld [vmem:[#allocation10 + $0x28] sm:$0xff]
    %v893 = vld [vmem:[#allocation10 + $0x30] sm:$0xff]
    %v894 = vld [vmem:[#allocation10 + $0x38] sm:$0xff]
    %v895 = vld [vmem:[#allocation10 + $0x40] sm:$0xff]
    %v896 = vld [vmem:[#allocation10 + $0x48] sm:$0xff]
    %v897 = vld [vmem:[#allocation10 + $0x50] sm:$0xff]
    %v898 = vld [vmem:[#allocation10 + $0x58] sm:$0xff]
    %v899 = vld [vmem:[#allocation10 + $0x60] sm:$0xff]
    %v900 = vld [vmem:[#allocation10 + $0x68] sm:$0xff]
    %v901 = vld [vmem:[#allocation10 + $0x70] sm:$0xff]
    %v902 = vld [vmem:[#allocation10 + $0x78] sm:$0xff]
    %v903 = vmul.f32 %v887, 0.01
    %v904 = vmul.f32 %v888, 0.01
    %v905 = vmul.f32 %v889, 0.01
    %v906 = vmul.f32 %v890, 0.01
    %v907 = vmul.f32 %v891, 0.01
    %v908 = vmul.f32 %v892, 0.01
    %v909 = vmul.f32 %v893, 0.01
    %v910 = vmul.f32 %v894, 0.01
    %v911 = vmul.f32 %v895, 0.01
    %v912 = vmul.f32 %v896, 0.01
    %v913 = vmul.f32 %v897, 0.01
    %v914 = vmul.f32 %v898, 0.01
    %v915 = vmul.f32 %v899, 0.01
    %v916 = vmul.f32 %v900, 0.01
    %v917 = vmul.f32 %v901, 0.01
    %v918 = vmul.f32 %v902, 0.01
    %v919 = vadd.f32 %v868, %v903
    %v920 = vadd.f32 %v869, %v904
    %v921 = vadd.f32 %v870, %v905
    %v922 = vadd.f32 %v871, %v906
    %v923 = vadd.f32 %v872, %v907
    %v924 = vadd.f32 %v873, %v908
    %v925 = vadd.f32 %v874, %v909
    %v926 = vadd.f32 %v875, %v910
    %v927 = vadd.f32 %v876, %v911
    %v928 = vadd.f32 %v877, %v912
    %v929 = vadd.f32 %v878, %v913
    %v930 = vadd.f32 %v879, %v914
    %v931 = vadd.f32 %v880, %v915
    %v932 = vadd.f32 %v881, %v916
    %v933 = vadd.f32 %v882, %v917
    %v934 = vadd.f32 %v883, %v918
    %v935 = vsel %vm886, %v919, -1.0
    %v936 = vsel %vm886, %v920, -1.0
    %v937 = vsel %vm886, %v921, -1.0
    %v938 = vsel %vm886, %v922, -1.0
    %v939 = vsel %vm886, %v923, -1.0
    %v940 = vsel %vm886, %v924, -1.0
    %v941 = vsel %vm886, %v925, -1.0
    %v942 = vsel %vm886, %v926, -1.0
    %v943 = vsel %vm886, %v927, -1.0
    %v944 = vsel %vm886, %v928, -1.0
    %v945 = vsel %vm886, %v929, -1.0
    %v946 = vsel %vm886, %v930, -1.0
    %v947 = vsel %vm886, %v931, -1.0
    %v948 = vsel %vm886, %v932, -1.0
    %v949 = vsel %vm886, %v933, -1.0
    %v950 = vsel %vm886, %v934, -1.0
    %951 = vmax.xlane.f32.xlu0 %v935
    %v952 = vpop.xlane.xlu0 %951
    %953 = vmax.xlane.f32.xlu0 %v936
    %v954 = vpop.xlane.xlu0 %953
    %955 = vmax.xlane.f32.xlu0 %v937
    %v956 = vpop.xlane.xlu0 %955
    %957 = vmax.xlane.f32.xlu0 %v938
    %v958 = vpop.xlane.xlu0 %957
    %959 = vmax.xlane.f32.xlu0 %v939
    %v960 = vpop.xlane.xlu0 %959
    %961 = vmax.xlane.f32.xlu0 %v940
    %v962 = vpop.xlane.xlu0 %961
    %963 = vmax.xlane.f32.xlu0 %v941
    %v964 = vpop.xlane.xlu0 %963
    %965 = vmax.xlane.f32.xlu0 %v942
    %v966 = vpop.xlane.xlu0 %965
    %967 = vmax.xlane.f32.xlu0 %v943
    %v968 = vpop.xlane.xlu0 %967
    %969 = vmax.xlane.f32.xlu0 %v944
    %v970 = vpop.xlane.xlu0 %969
    %971 = vmax.xlane.f32.xlu0 %v945
    %v972 = vpop.xlane.xlu0 %971
    %973 = vmax.xlane.f32.xlu0 %v946
    %v974 = vpop.xlane.xlu0 %973
    %975 = vmax.xlane.f32.xlu0 %v947
    %v976 = vpop.xlane.xlu0 %975
    %977 = vmax.xlane.f32.xlu0 %v948
    %v978 = vpop.xlane.xlu0 %977
    %979 = vmax.xlane.f32.xlu0 %v949
    %v980 = vpop.xlane.xlu0 %979
    %981 = vmax.xlane.f32.xlu0 %v950
    %v982 = vpop.xlane.xlu0 %981
    %vm983 = vcmp.ge.f32.partialorder %v935, %v952
    %vm984 = vcmp.ge.f32.partialorder %v936, %v954
    %vm985 = vcmp.ge.f32.partialorder %v937, %v956
    %vm986 = vcmp.ge.f32.partialorder %v938, %v958
    %vm987 = vcmp.ge.f32.partialorder %v939, %v960
    %vm988 = vcmp.ge.f32.partialorder %v940, %v962
    %vm989 = vcmp.ge.f32.partialorder %v941, %v964
    %vm990 = vcmp.ge.f32.partialorder %v942, %v966
    %vm991 = vcmp.ge.f32.partialorder %v943, %v968
    %vm992 = vcmp.ge.f32.partialorder %v944, %v970
    %vm993 = vcmp.ge.f32.partialorder %v945, %v972
    %vm994 = vcmp.ge.f32.partialorder %v946, %v974
    %vm995 = vcmp.ge.f32.partialorder %v947, %v976
    %vm996 = vcmp.ge.f32.partialorder %v948, %v978
    %vm997 = vcmp.ge.f32.partialorder %v949, %v980
    %vm998 = vcmp.ge.f32.partialorder %v950, %v982
    %v999 = vsel %vm983, -inf, %v935
    %v1000 = vsel %vm984, -inf, %v936
    %v1001 = vsel %vm985, -inf, %v937
    %v1002 = vsel %vm986, -inf, %v938
    %v1003 = vsel %vm987, -inf, %v939
    %v1004 = vsel %vm988, -inf, %v940
    %v1005 = vsel %vm989, -inf, %v941
    %v1006 = vsel %vm990, -inf, %v942
    %v1007 = vsel %vm991, -inf, %v943
    %v1008 = vsel %vm992, -inf, %v944
    %v1009 = vsel %vm993, -inf, %v945
    %v1010 = vsel %vm994, -inf, %v946
    %v1011 = vsel %vm995, -inf, %v947
    %v1012 = vsel %vm996, -inf, %v948
    %v1013 = vsel %vm997, -inf, %v949
    %v1014 = vsel %vm998, -inf, %v950
    %1015 = vmax.xlane.f32.xlu0 %v999
    %v1016 = vpop.xlane.xlu0 %1015
    %1017 = vmax.xlane.f32.xlu0 %v1000
    %v1018 = vpop.xlane.xlu0 %1017
    %1019 = vmax.xlane.f32.xlu0 %v1001
    %v1020 = vpop.xlane.xlu0 %1019
    %1021 = vmax.xlane.f32.xlu0 %v1002
    %v1022 = vpop.xlane.xlu0 %1021
    %1023 = vmax.xlane.f32.xlu0 %v1003
    %v1024 = vpop.xlane.xlu0 %1023
    %1025 = vmax.xlane.f32.xlu0 %v1004
    %v1026 = vpop.xlane.xlu0 %1025
    %1027 = vmax.xlane.f32.xlu0 %v1005
    %v1028 = vpop.xlane.xlu0 %1027
    %1029 = vmax.xlane.f32.xlu0 %v1006
    %v1030 = vpop.xlane.xlu0 %1029
    %1031 = vmax.xlane.f32.xlu0 %v1007
    %v1032 = vpop.xlane.xlu0 %1031
    %1033 = vmax.xlane.f32.xlu0 %v1008
    %v1034 = vpop.xlane.xlu0 %1033
    %1035 = vmax.xlane.f32.xlu0 %v1009
    %v1036 = vpop.xlane.xlu0 %1035
    %1037 = vmax.xlane.f32.xlu0 %v1010
    %v1038 = vpop.xlane.xlu0 %1037
    %1039 = vmax.xlane.f32.xlu0 %v1011
    %v1040 = vpop.xlane.xlu0 %1039
    %1041 = vmax.xlane.f32.xlu0 %v1012
    %v1042 = vpop.xlane.xlu0 %1041
    %1043 = vmax.xlane.f32.xlu0 %v1013
    %v1044 = vpop.xlane.xlu0 %1043
    %1045 = vmax.xlane.f32.xlu0 %v1014
    %v1046 = vpop.xlane.xlu0 %1045
    %vm1047 = vcmp.ge.f32.partialorder %v999, %v1016
    %vm1048 = vcmp.ge.f32.partialorder %v1000, %v1018
    %vm1049 = vcmp.ge.f32.partialorder %v1001, %v1020
    %vm1050 = vcmp.ge.f32.partialorder %v1002, %v1022
    %vm1051 = vcmp.ge.f32.partialorder %v1003, %v1024
    %vm1052 = vcmp.ge.f32.partialorder %v1004, %v1026
    %vm1053 = vcmp.ge.f32.partialorder %v1005, %v1028
    %vm1054 = vcmp.ge.f32.partialorder %v1006, %v1030
    %vm1055 = vcmp.ge.f32.partialorder %v1007, %v1032
    %vm1056 = vcmp.ge.f32.partialorder %v1008, %v1034
    %vm1057 = vcmp.ge.f32.partialorder %v1009, %v1036
    %vm1058 = vcmp.ge.f32.partialorder %v1010, %v1038
    %vm1059 = vcmp.ge.f32.partialorder %v1011, %v1040
    %vm1060 = vcmp.ge.f32.partialorder %v1012, %v1042
    %vm1061 = vcmp.ge.f32.partialorder %v1013, %v1044
    %vm1062 = vcmp.ge.f32.partialorder %v1014, %v1046
    %v1063 = vsel %vm1047, -inf, %v999
    %v1064 = vsel %vm1048, -inf, %v1000
    %v1065 = vsel %vm1049, -inf, %v1001
    %v1066 = vsel %vm1050, -inf, %v1002
    %v1067 = vsel %vm1051, -inf, %v1003
    %v1068 = vsel %vm1052, -inf, %v1004
    %v1069 = vsel %vm1053, -inf, %v1005
    %v1070 = vsel %vm1054, -inf, %v1006
    %v1071 = vsel %vm1055, -inf, %v1007
    %v1072 = vsel %vm1056, -inf, %v1008
    %v1073 = vsel %vm1057, -inf, %v1009
    %v1074 = vsel %vm1058, -inf, %v1010
    %v1075 = vsel %vm1059, -inf, %v1011
    %v1076 = vsel %vm1060, -inf, %v1012
    %v1077 = vsel %vm1061, -inf, %v1013
    %v1078 = vsel %vm1062, -inf, %v1014
    %1079 = vmax.xlane.f32.xlu0 %v1063
    %v1080 = vpop.xlane.xlu0 %1079
    %1081 = vmax.xlane.f32.xlu0 %v1064
    %v1082 = vpop.xlane.xlu0 %1081
    %1083 = vmax.xlane.f32.xlu0 %v1065
    %v1084 = vpop.xlane.xlu0 %1083
    %1085 = vmax.xlane.f32.xlu0 %v1066
    %v1086 = vpop.xlane.xlu0 %1085
    %1087 = vmax.xlane.f32.xlu0 %v1067
    %v1088 = vpop.xlane.xlu0 %1087
    %1089 = vmax.xlane.f32.xlu0 %v1068
    %v1090 = vpop.xlane.xlu0 %1089
    %1091 = vmax.xlane.f32.xlu0 %v1069
    %v1092 = vpop.xlane.xlu0 %1091
    %1093 = vmax.xlane.f32.xlu0 %v1070
    %v1094 = vpop.xlane.xlu0 %1093
    %1095 = vmax.xlane.f32.xlu0 %v1071
    %v1096 = vpop.xlane.xlu0 %1095
    %1097 = vmax.xlane.f32.xlu0 %v1072
    %v1098 = vpop.xlane.xlu0 %1097
    %1099 = vmax.xlane.f32.xlu0 %v1073
    %v1100 = vpop.xlane.xlu0 %1099
    %1101 = vmax.xlane.f32.xlu0 %v1074
    %v1102 = vpop.xlane.xlu0 %1101
    %1103 = vmax.xlane.f32.xlu0 %v1075
    %v1104 = vpop.xlane.xlu0 %1103
    %1105 = vmax.xlane.f32.xlu0 %v1076
    %v1106 = vpop.xlane.xlu0 %1105
    %1107 = vmax.xlane.f32.xlu0 %v1077
    %v1108 = vpop.xlane.xlu0 %1107
    %1109 = vmax.xlane.f32.xlu0 %v1078
    %v1110 = vpop.xlane.xlu0 %1109
    %vm1111 = vcmp.ge.f32.partialorder %v1063, %v1080
    %vm1112 = vcmp.ge.f32.partialorder %v1064, %v1082
    %vm1113 = vcmp.ge.f32.partialorder %v1065, %v1084
    %vm1114 = vcmp.ge.f32.partialorder %v1066, %v1086
    %vm1115 = vcmp.ge.f32.partialorder %v1067, %v1088
    %vm1116 = vcmp.ge.f32.partialorder %v1068, %v1090
    %vm1117 = vcmp.ge.f32.partialorder %v1069, %v1092
    %vm1118 = vcmp.ge.f32.partialorder %v1070, %v1094
    %vm1119 = vcmp.ge.f32.partialorder %v1071, %v1096
    %vm1120 = vcmp.ge.f32.partialorder %v1072, %v1098
    %vm1121 = vcmp.ge.f32.partialorder %v1073, %v1100
    %vm1122 = vcmp.ge.f32.partialorder %v1074, %v1102
    %vm1123 = vcmp.ge.f32.partialorder %v1075, %v1104
    %vm1124 = vcmp.ge.f32.partialorder %v1076, %v1106
    %vm1125 = vcmp.ge.f32.partialorder %v1077, %v1108
    %vm1126 = vcmp.ge.f32.partialorder %v1078, %v1110
    %v1127 = vsel %vm1111, -inf, %v1063
    %v1128 = vsel %vm1112, -inf, %v1064
    %v1129 = vsel %vm1113, -inf, %v1065
    %v1130 = vsel %vm1114, -inf, %v1066
    %v1131 = vsel %vm1115, -inf, %v1067
    %v1132 = vsel %vm1116, -inf, %v1068
    %v1133 = vsel %vm1117, -inf, %v1069
    %v1134 = vsel %vm1118, -inf, %v1070
    %v1135 = vsel %vm1119, -inf, %v1071
    %v1136 = vsel %vm1120, -inf, %v1072
    %v1137 = vsel %vm1121, -inf, %v1073
    %v1138 = vsel %vm1122, -inf, %v1074
    %v1139 = vsel %vm1123, -inf, %v1075
    %v1140 = vsel %vm1124, -inf, %v1076
    %v1141 = vsel %vm1125, -inf, %v1077
    %v1142 = vsel %vm1126, -inf, %v1078
    %1143 = vmax.xlane.f32.xlu0 %v1127
    %v1144 = vpop.xlane.xlu0 %1143
    %1145 = vmax.xlane.f32.xlu0 %v1128
    %v1146 = vpop.xlane.xlu0 %1145
    %1147 = vmax.xlane.f32.xlu0 %v1129
    %v1148 = vpop.xlane.xlu0 %1147
    %1149 = vmax.xlane.f32.xlu0 %v1130
    %v1150 = vpop.xlane.xlu0 %1149
    %1151 = vmax.xlane.f32.xlu0 %v1131
    %v1152 = vpop.xlane.xlu0 %1151
    %1153 = vmax.xlane.f32.xlu0 %v1132
    %v1154 = vpop.xlane.xlu0 %1153
    %1155 = vmax.xlane.f32.xlu0 %v1133
    %v1156 = vpop.xlane.xlu0 %1155
    %1157 = vmax.xlane.f32.xlu0 %v1134
    %v1158 = vpop.xlane.xlu0 %1157
    %1159 = vmax.xlane.f32.xlu0 %v1135
    %v1160 = vpop.xlane.xlu0 %1159
    %1161 = vmax.xlane.f32.xlu0 %v1136
    %v1162 = vpop.xlane.xlu0 %1161
    %1163 = vmax.xlane.f32.xlu0 %v1137
    %v1164 = vpop.xlane.xlu0 %1163
    %1165 = vmax.xlane.f32.xlu0 %v1138
    %v1166 = vpop.xlane.xlu0 %1165
    %1167 = vmax.xlane.f32.xlu0 %v1139
    %v1168 = vpop.xlane.xlu0 %1167
    %1169 = vmax.xlane.f32.xlu0 %v1140
    %v1170 = vpop.xlane.xlu0 %1169
    %1171 = vmax.xlane.f32.xlu0 %v1141
    %v1172 = vpop.xlane.xlu0 %1171
    %1173 = vmax.xlane.f32.xlu0 %v1142
    %v1174 = vpop.xlane.xlu0 %1173
    %vm1175 = vcmp.ge.f32.partialorder %v1127, %v1144
    %vm1176 = vcmp.ge.f32.partialorder %v1128, %v1146
    %vm1177 = vcmp.ge.f32.partialorder %v1129, %v1148
    %vm1178 = vcmp.ge.f32.partialorder %v1130, %v1150
    %vm1179 = vcmp.ge.f32.partialorder %v1131, %v1152
    %vm1180 = vcmp.ge.f32.partialorder %v1132, %v1154
    %vm1181 = vcmp.ge.f32.partialorder %v1133, %v1156
    %vm1182 = vcmp.ge.f32.partialorder %v1134, %v1158
    %vm1183 = vcmp.ge.f32.partialorder %v1135, %v1160
    %vm1184 = vcmp.ge.f32.partialorder %v1136, %v1162
    %vm1185 = vcmp.ge.f32.partialorder %v1137, %v1164
    %vm1186 = vcmp.ge.f32.partialorder %v1138, %v1166
    %vm1187 = vcmp.ge.f32.partialorder %v1139, %v1168
    %vm1188 = vcmp.ge.f32.partialorder %v1140, %v1170
    %vm1189 = vcmp.ge.f32.partialorder %v1141, %v1172
    %vm1190 = vcmp.ge.f32.partialorder %v1142, %v1174
    %v1191 = vsel %vm1175, -inf, %v1127
    %v1192 = vsel %vm1176, -inf, %v1128
    %v1193 = vsel %vm1177, -inf, %v1129
    %v1194 = vsel %vm1178, -inf, %v1130
    %v1195 = vsel %vm1179, -inf, %v1131
    %v1196 = vsel %vm1180, -inf, %v1132
    %v1197 = vsel %vm1181, -inf, %v1133
    %v1198 = vsel %vm1182, -inf, %v1134
    %v1199 = vsel %vm1183, -inf, %v1135
    %v1200 = vsel %vm1184, -inf, %v1136
    %v1201 = vsel %vm1185, -inf, %v1137
    %v1202 = vsel %vm1186, -inf, %v1138
    %v1203 = vsel %vm1187, -inf, %v1139
    %v1204 = vsel %vm1188, -inf, %v1140
    %v1205 = vsel %vm1189, -inf, %v1141
    %v1206 = vsel %vm1190, -inf, %v1142
    %1207 = vmax.xlane.f32.xlu0 %v1191
    %v1208 = vpop.xlane.xlu0 %1207
    %1209 = vmax.xlane.f32.xlu0 %v1192
    %v1210 = vpop.xlane.xlu0 %1209
    %1211 = vmax.xlane.f32.xlu0 %v1193
    %v1212 = vpop.xlane.xlu0 %1211
    %1213 = vmax.xlane.f32.xlu0 %v1194
    %v1214 = vpop.xlane.xlu0 %1213
    %1215 = vmax.xlane.f32.xlu0 %v1195
    %v1216 = vpop.xlane.xlu0 %1215
    %1217 = vmax.xlane.f32.xlu0 %v1196
    %v1218 = vpop.xlane.xlu0 %1217
    %1219 = vmax.xlane.f32.xlu0 %v1197
    %v1220 = vpop.xlane.xlu0 %1219
    %1221 = vmax.xlane.f32.xlu0 %v1198
    %v1222 = vpop.xlane.xlu0 %1221
    %1223 = vmax.xlane.f32.xlu0 %v1199
    %v1224 = vpop.xlane.xlu0 %1223
    %1225 = vmax.xlane.f32.xlu0 %v1200
    %v1226 = vpop.xlane.xlu0 %1225
    %1227 = vmax.xlane.f32.xlu0 %v1201
    %v1228 = vpop.xlane.xlu0 %1227
    %1229 = vmax.xlane.f32.xlu0 %v1202
    %v1230 = vpop.xlane.xlu0 %1229
    %1231 = vmax.xlane.f32.xlu0 %v1203
    %v1232 = vpop.xlane.xlu0 %1231
    %1233 = vmax.xlane.f32.xlu0 %v1204
    %v1234 = vpop.xlane.xlu0 %1233
    %1235 = vmax.xlane.f32.xlu0 %v1205
    %v1236 = vpop.xlane.xlu0 %1235
    %1237 = vmax.xlane.f32.xlu0 %v1206
    %v1238 = vpop.xlane.xlu0 %1237
    %vm1239 = vcmp.ge.f32.partialorder %v1191, %v1208
    %vm1240 = vcmp.ge.f32.partialorder %v1192, %v1210
    %vm1241 = vcmp.ge.f32.partialorder %v1193, %v1212
    %vm1242 = vcmp.ge.f32.partialorder %v1194, %v1214
    %vm1243 = vcmp.ge.f32.partialorder %v1195, %v1216
    %vm1244 = vcmp.ge.f32.partialorder %v1196, %v1218
    %vm1245 = vcmp.ge.f32.partialorder %v1197, %v1220
    %vm1246 = vcmp.ge.f32.partialorder %v1198, %v1222
    %vm1247 = vcmp.ge.f32.partialorder %v1199, %v1224
    %vm1248 = vcmp.ge.f32.partialorder %v1200, %v1226
    %vm1249 = vcmp.ge.f32.partialorder %v1201, %v1228
    %vm1250 = vcmp.ge.f32.partialorder %v1202, %v1230
    %vm1251 = vcmp.ge.f32.partialorder %v1203, %v1232
    %vm1252 = vcmp.ge.f32.partialorder %v1204, %v1234
    %vm1253 = vcmp.ge.f32.partialorder %v1205, %v1236
    %vm1254 = vcmp.ge.f32.partialorder %v1206, %v1238
    %v1255 = vsel %vm1239, -inf, %v1191
    %v1256 = vsel %vm1240, -inf, %v1192
    %v1257 = vsel %vm1241, -inf, %v1193
    %v1258 = vsel %vm1242, -inf, %v1194
    %v1259 = vsel %vm1243, -inf, %v1195
    %v1260 = vsel %vm1244, -inf, %v1196
    %v1261 = vsel %vm1245, -inf, %v1197
    %v1262 = vsel %vm1246, -inf, %v1198
    %v1263 = vsel %vm1247, -inf, %v1199
    %v1264 = vsel %vm1248, -inf, %v1200
    %v1265 = vsel %vm1249, -inf, %v1201
    %v1266 = vsel %vm1250, -inf, %v1202
    %v1267 = vsel %vm1251, -inf, %v1203
    %v1268 = vsel %vm1252, -inf, %v1204
    %v1269 = vsel %vm1253, -inf, %v1205
    %v1270 = vsel %vm1254, -inf, %v1206
    %1271 = vmax.xlane.f32.xlu0 %v1255
    %v1272 = vpop.xlane.xlu0 %1271
    %1273 = vmax.xlane.f32.xlu0 %v1256
    %v1274 = vpop.xlane.xlu0 %1273
    %1275 = vmax.xlane.f32.xlu0 %v1257
    %v1276 = vpop.xlane.xlu0 %1275
    %1277 = vmax.xlane.f32.xlu0 %v1258
    %v1278 = vpop.xlane.xlu0 %1277
    %1279 = vmax.xlane.f32.xlu0 %v1259
    %v1280 = vpop.xlane.xlu0 %1279
    %1281 = vmax.xlane.f32.xlu0 %v1260
    %v1282 = vpop.xlane.xlu0 %1281
    %1283 = vmax.xlane.f32.xlu0 %v1261
    %v1284 = vpop.xlane.xlu0 %1283
    %1285 = vmax.xlane.f32.xlu0 %v1262
    %v1286 = vpop.xlane.xlu0 %1285
    %1287 = vmax.xlane.f32.xlu0 %v1263
    %v1288 = vpop.xlane.xlu0 %1287
    %1289 = vmax.xlane.f32.xlu0 %v1264
    %v1290 = vpop.xlane.xlu0 %1289
    %1291 = vmax.xlane.f32.xlu0 %v1265
    %v1292 = vpop.xlane.xlu0 %1291
    %1293 = vmax.xlane.f32.xlu0 %v1266
    %v1294 = vpop.xlane.xlu0 %1293
    %1295 = vmax.xlane.f32.xlu0 %v1267
    %v1296 = vpop.xlane.xlu0 %1295
    %1297 = vmax.xlane.f32.xlu0 %v1268
    %v1298 = vpop.xlane.xlu0 %1297
    %1299 = vmax.xlane.f32.xlu0 %v1269
    %v1300 = vpop.xlane.xlu0 %1299
    %1301 = vmax.xlane.f32.xlu0 %v1270
    %v1302 = vpop.xlane.xlu0 %1301
    %vm1303 = vcmp.ge.f32.partialorder %v1255, %v1272
    %vm1304 = vcmp.ge.f32.partialorder %v1256, %v1274
    %vm1305 = vcmp.ge.f32.partialorder %v1257, %v1276
    %vm1306 = vcmp.ge.f32.partialorder %v1258, %v1278
    %vm1307 = vcmp.ge.f32.partialorder %v1259, %v1280
    %vm1308 = vcmp.ge.f32.partialorder %v1260, %v1282
    %vm1309 = vcmp.ge.f32.partialorder %v1261, %v1284
    %vm1310 = vcmp.ge.f32.partialorder %v1262, %v1286
    %vm1311 = vcmp.ge.f32.partialorder %v1263, %v1288
    %vm1312 = vcmp.ge.f32.partialorder %v1264, %v1290
    %vm1313 = vcmp.ge.f32.partialorder %v1265, %v1292
    %vm1314 = vcmp.ge.f32.partialorder %v1266, %v1294
    %vm1315 = vcmp.ge.f32.partialorder %v1267, %v1296
    %vm1316 = vcmp.ge.f32.partialorder %v1268, %v1298
    %vm1317 = vcmp.ge.f32.partialorder %v1269, %v1300
    %vm1318 = vcmp.ge.f32.partialorder %v1270, %v1302
    %v1319 = vsel %vm1303, -inf, %v1255
    %v1320 = vsel %vm1304, -inf, %v1256
    %v1321 = vsel %vm1305, -inf, %v1257
    %v1322 = vsel %vm1306, -inf, %v1258
    %v1323 = vsel %vm1307, -inf, %v1259
    %v1324 = vsel %vm1308, -inf, %v1260
    %v1325 = vsel %vm1309, -inf, %v1261
    %v1326 = vsel %vm1310, -inf, %v1262
    %v1327 = vsel %vm1311, -inf, %v1263
    %v1328 = vsel %vm1312, -inf, %v1264
    %v1329 = vsel %vm1313, -inf, %v1265
    %v1330 = vsel %vm1314, -inf, %v1266
    %v1331 = vsel %vm1315, -inf, %v1267
    %v1332 = vsel %vm1316, -inf, %v1268
    %v1333 = vsel %vm1317, -inf, %v1269
    %v1334 = vsel %vm1318, -inf, %v1270
    %1335 = vmax.xlane.f32.xlu0 %v1319
    %v1336 = vpop.xlane.xlu0 %1335
    %1337 = vmax.xlane.f32.xlu0 %v1320
    %v1338 = vpop.xlane.xlu0 %1337
    %1339 = vmax.xlane.f32.xlu0 %v1321
    %v1340 = vpop.xlane.xlu0 %1339
    %1341 = vmax.xlane.f32.xlu0 %v1322
    %v1342 = vpop.xlane.xlu0 %1341
    %1343 = vmax.xlane.f32.xlu0 %v1323
    %v1344 = vpop.xlane.xlu0 %1343
    %1345 = vmax.xlane.f32.xlu0 %v1324
    %v1346 = vpop.xlane.xlu0 %1345
    %1347 = vmax.xlane.f32.xlu0 %v1325
    %v1348 = vpop.xlane.xlu0 %1347
    %1349 = vmax.xlane.f32.xlu0 %v1326
    %v1350 = vpop.xlane.xlu0 %1349
    %1351 = vmax.xlane.f32.xlu0 %v1327
    %v1352 = vpop.xlane.xlu0 %1351
    %1353 = vmax.xlane.f32.xlu0 %v1328
    %v1354 = vpop.xlane.xlu0 %1353
    %1355 = vmax.xlane.f32.xlu0 %v1329
    %v1356 = vpop.xlane.xlu0 %1355
    %1357 = vmax.xlane.f32.xlu0 %v1330
    %v1358 = vpop.xlane.xlu0 %1357
    %1359 = vmax.xlane.f32.xlu0 %v1331
    %v1360 = vpop.xlane.xlu0 %1359
    %1361 = vmax.xlane.f32.xlu0 %v1332
    %v1362 = vpop.xlane.xlu0 %1361
    %1363 = vmax.xlane.f32.xlu0 %v1333
    %v1364 = vpop.xlane.xlu0 %1363
    %1365 = vmax.xlane.f32.xlu0 %v1334
    %v1366 = vpop.xlane.xlu0 %1365
    %vm1367 = vcmp.ge.f32.partialorder %v1319, %v1336
    %vm1368 = vcmp.ge.f32.partialorder %v1320, %v1338
    %vm1369 = vcmp.ge.f32.partialorder %v1321, %v1340
    %vm1370 = vcmp.ge.f32.partialorder %v1322, %v1342
    %vm1371 = vcmp.ge.f32.partialorder %v1323, %v1344
    %vm1372 = vcmp.ge.f32.partialorder %v1324, %v1346
    %vm1373 = vcmp.ge.f32.partialorder %v1325, %v1348
    %vm1374 = vcmp.ge.f32.partialorder %v1326, %v1350
    %vm1375 = vcmp.ge.f32.partialorder %v1327, %v1352
    %vm1376 = vcmp.ge.f32.partialorder %v1328, %v1354
    %vm1377 = vcmp.ge.f32.partialorder %v1329, %v1356
    %vm1378 = vcmp.ge.f32.partialorder %v1330, %v1358
    %vm1379 = vcmp.ge.f32.partialorder %v1331, %v1360
    %vm1380 = vcmp.ge.f32.partialorder %v1332, %v1362
    %vm1381 = vcmp.ge.f32.partialorder %v1333, %v1364
    %vm1382 = vcmp.ge.f32.partialorder %v1334, %v1366
    %v1383 = vsel %vm1367, -inf, %v1319
    %v1384 = vsel %vm1368, -inf, %v1320
    %v1385 = vsel %vm1369, -inf, %v1321
    %v1386 = vsel %vm1370, -inf, %v1322
    %v1387 = vsel %vm1371, -inf, %v1323
    %v1388 = vsel %vm1372, -inf, %v1324
    %v1389 = vsel %vm1373, -inf, %v1325
    %v1390 = vsel %vm1374, -inf, %v1326
    %v1391 = vsel %vm1375, -inf, %v1327
    %v1392 = vsel %vm1376, -inf, %v1328
    %v1393 = vsel %vm1377, -inf, %v1329
    %v1394 = vsel %vm1378, -inf, %v1330
    %v1395 = vsel %vm1379, -inf, %v1331
    %v1396 = vsel %vm1380, -inf, %v1332
    %v1397 = vsel %vm1381, -inf, %v1333
    %v1398 = vsel %vm1382, -inf, %v1334
    %1399 = vmax.xlane.f32.xlu0 %v1383
    %v1400 = vpop.xlane.xlu0 %1399
    %1401 = vmax.xlane.f32.xlu0 %v1384
    %v1402 = vpop.xlane.xlu0 %1401
    %1403 = vmax.xlane.f32.xlu0 %v1385
    %v1404 = vpop.xlane.xlu0 %1403
    %1405 = vmax.xlane.f32.xlu0 %v1386
    %v1406 = vpop.xlane.xlu0 %1405
    %1407 = vmax.xlane.f32.xlu0 %v1387
    %v1408 = vpop.xlane.xlu0 %1407
    %1409 = vmax.xlane.f32.xlu0 %v1388
    %v1410 = vpop.xlane.xlu0 %1409
    %1411 = vmax.xlane.f32.xlu0 %v1389
    %v1412 = vpop.xlane.xlu0 %1411
    %1413 = vmax.xlane.f32.xlu0 %v1390
    %v1414 = vpop.xlane.xlu0 %1413
    %1415 = vmax.xlane.f32.xlu0 %v1391
    %v1416 = vpop.xlane.xlu0 %1415
    %1417 = vmax.xlane.f32.xlu0 %v1392
    %v1418 = vpop.xlane.xlu0 %1417
    %1419 = vmax.xlane.f32.xlu0 %v1393
    %v1420 = vpop.xlane.xlu0 %1419
    %1421 = vmax.xlane.f32.xlu0 %v1394
    %v1422 = vpop.xlane.xlu0 %1421
    %1423 = vmax.xlane.f32.xlu0 %v1395
    %v1424 = vpop.xlane.xlu0 %1423
    %1425 = vmax.xlane.f32.xlu0 %v1396
    %v1426 = vpop.xlane.xlu0 %1425
    %1427 = vmax.xlane.f32.xlu0 %v1397
    %v1428 = vpop.xlane.xlu0 %1427
    %1429 = vmax.xlane.f32.xlu0 %v1398
    %v1430 = vpop.xlane.xlu0 %1429
    %vm1431 = vcmp.ge.f32.partialorder %v935, %v1400
    %vm1432 = vcmp.ge.f32.partialorder %v936, %v1402
    %vm1433 = vcmp.ge.f32.partialorder %v937, %v1404
    %vm1434 = vcmp.ge.f32.partialorder %v938, %v1406
    %vm1435 = vcmp.ge.f32.partialorder %v939, %v1408
    %vm1436 = vcmp.ge.f32.partialorder %v940, %v1410
    %vm1437 = vcmp.ge.f32.partialorder %v941, %v1412
    %vm1438 = vcmp.ge.f32.partialorder %v942, %v1414
    %vm1439 = vcmp.ge.f32.partialorder %v943, %v1416
    %vm1440 = vcmp.ge.f32.partialorder %v944, %v1418
    %vm1441 = vcmp.ge.f32.partialorder %v945, %v1420
    %vm1442 = vcmp.ge.f32.partialorder %v946, %v1422
    %vm1443 = vcmp.ge.f32.partialorder %v947, %v1424
    %vm1444 = vcmp.ge.f32.partialorder %v948, %v1426
    %vm1445 = vcmp.ge.f32.partialorder %v949, %v1428
    %vm1446 = vcmp.ge.f32.partialorder %v950, %v1430
    %vm1447 = vmand %vm1431, %vm886
    %vm1448 = vmand %vm1432, %vm886
    %vm1449 = vmand %vm1433, %vm886
    %vm1450 = vmand %vm1434, %vm886
    %vm1451 = vmand %vm1435, %vm886
    %vm1452 = vmand %vm1436, %vm886
    %vm1453 = vmand %vm1437, %vm886
    %vm1454 = vmand %vm1438, %vm886
    %vm1455 = vmand %vm1439, %vm886
    %vm1456 = vmand %vm1440, %vm886
    %vm1457 = vmand %vm1441, %vm886
    %vm1458 = vmand %vm1442, %vm886
    %vm1459 = vmand %vm1443, %vm886
    %vm1460 = vmand %vm1444, %vm886
    %vm1461 = vmand %vm1445, %vm886
    %vm1462 = vmand %vm1446, %vm886
    %v1463 = vsel %vm886, %v868, 0.0
    %v1464 = vsel %vm886, %v869, 0.0
    %v1465 = vsel %vm886, %v870, 0.0
    %v1466 = vsel %vm886, %v871, 0.0
    %v1467 = vsel %vm886, %v872, 0.0
    %v1468 = vsel %vm886, %v873, 0.0
    %v1469 = vsel %vm886, %v874, 0.0
    %v1470 = vsel %vm886, %v875, 0.0
    %v1471 = vsel %vm886, %v876, 0.0
    %v1472 = vsel %vm886, %v877, 0.0
    %v1473 = vsel %vm886, %v878, 0.0
    %v1474 = vsel %vm886, %v879, 0.0
    %v1475 = vsel %vm886, %v880, 0.0
    %v1476 = vsel %vm886, %v881, 0.0
    %v1477 = vsel %vm886, %v882, 0.0
    %v1478 = vsel %vm886, %v883, 0.0
    %1479 = vst [vmem:[#allocation12] sm:$0xff] %v1463
    %1480 = vst [vmem:[#allocation12 + $0x8] sm:$0xff] %v1464
    %1481 = vst [vmem:[#allocation12 + $0x10] sm:$0xff] %v1465
    %1482 = vst [vmem:[#allocation12 + $0x18] sm:$0xff] %v1466
    %1483 = vst [vmem:[#allocation12 + $0x20] sm:$0xff] %v1467
    %1484 = vst [vmem:[#allocation12 + $0x28] sm:$0xff] %v1468
    %1485 = vst [vmem:[#allocation12 + $0x30] sm:$0xff] %v1469
    %1486 = vst [vmem:[#allocation12 + $0x38] sm:$0xff] %v1470
    %1487 = vst [vmem:[#allocation12 + $0x40] sm:$0xff] %v1471
    %1488 = vst [vmem:[#allocation12 + $0x48] sm:$0xff] %v1472
    %1489 = vst [vmem:[#allocation12 + $0x50] sm:$0xff] %v1473
    %1490 = vst [vmem:[#allocation12 + $0x58] sm:$0xff] %v1474
    %1491 = vst [vmem:[#allocation12 + $0x60] sm:$0xff] %v1475
    %1492 = vst [vmem:[#allocation12 + $0x68] sm:$0xff] %v1476
    %1493 = vst [vmem:[#allocation12 + $0x70] sm:$0xff] %v1477
    %1494 = vst [vmem:[#allocation12 + $0x78] sm:$0xff] %v1478
    %v1495 = vsel %vm1447, %v868, 0.0
    %v1496 = vsel %vm1448, %v869, 0.0
    %v1497 = vsel %vm1449, %v870, 0.0
    %v1498 = vsel %vm1450, %v871, 0.0
    %v1499 = vsel %vm1451, %v872, 0.0
    %v1500 = vsel %vm1452, %v873, 0.0
    %v1501 = vsel %vm1453, %v874, 0.0
    %v1502 = vsel %vm1454, %v875, 0.0
    %v1503 = vsel %vm1455, %v876, 0.0
    %v1504 = vsel %vm1456, %v877, 0.0
    %v1505 = vsel %vm1457, %v878, 0.0
    %v1506 = vsel %vm1458, %v879, 0.0
    %v1507 = vsel %vm1459, %v880, 0.0
    %v1508 = vsel %vm1460, %v881, 0.0
    %v1509 = vsel %vm1461, %v882, 0.0
    %v1510 = vsel %vm1462, %v883, 0.0
    %1511 = vst [vmem:[#allocation11] sm:$0xff] %v1495
    %1512 = vst [vmem:[#allocation11 + $0x8] sm:$0xff] %v1496
    %1513 = vst [vmem:[#allocation11 + $0x10] sm:$0xff] %v1497
    %1514 = vst [vmem:[#allocation11 + $0x18] sm:$0xff] %v1498
    %1515 = vst [vmem:[#allocation11 + $0x20] sm:$0xff] %v1499
    %1516 = vst [vmem:[#allocation11 + $0x28] sm:$0xff] %v1500
    %1517 = vst [vmem:[#allocation11 + $0x30] sm:$0xff] %v1501
    %1518 = vst [vmem:[#allocation11 + $0x38] sm:$0xff] %v1502
    %1519 = vst [vmem:[#allocation11 + $0x40] sm:$0xff] %v1503
    %1520 = vst [vmem:[#allocation11 + $0x48] sm:$0xff] %v1504
    %1521 = vst [vmem:[#allocation11 + $0x50] sm:$0xff] %v1505
    %1522 = vst [vmem:[#allocation11 + $0x58] sm:$0xff] %v1506
    %1523 = vst [vmem:[#allocation11 + $0x60] sm:$0xff] %v1507
    %1524 = vst [vmem:[#allocation11 + $0x68] sm:$0xff] %v1508
    %1525 = vst [vmem:[#allocation11 + $0x70] sm:$0xff] %v1509
    %1526 = vst [vmem:[#allocation11 + $0x78] sm:$0xff] %v1510
    // Predicated region
    $region50: #{tpu_custom_call.1} parent=1 // pred_check
      _
    $region51: #{tpu_custom_call.1} parent=1 // pred_check_branch
      %1528 = sbr.rel (0) target = $region53
    $region52: #{tpu_custom_call.1} parent=1 // pred_region
      %s1530 = ssub.s32 2048, 2048
      %1531 = vsyncadd [#allocation4], %s1530
      %s1532 = sshll.u32 [#allocation11], 4
      %s1533 = int_to_ptr.vmem [resolvable:$true] %s1532
      %1538 = dma.vmem_to_hbm [thread:$0]  %s1533, 2048, %s7, [#allocation4], 128, 128, 8
    $region53: #{tpu_custom_call.1} parent=1 // pred_fallthru
      _
    // Predicated region
    $region54: #{tpu_custom_call.1} parent=1 // pred_check
      _
    $region55: #{tpu_custom_call.1} parent=1 // pred_check_branch
      %1540 = sbr.rel (0) target = $region57
    $region56: #{tpu_custom_call.1} parent=1 // pred_region
      %s1542 = ssub.s32 2048, 2048
      %1543 = vsyncadd [#allocation13], %s1542
      %s1544 = sshll.u32 [#allocation12], 4
      %s1545 = int_to_ptr.vmem [resolvable:$true] %s1544
      %1550 = dma.vmem_to_hbm [thread:$0]  %s1545, 2048, %s8, [#allocation13], 128, 128, 8
    $region57: #{tpu_custom_call.1} parent=1 // pred_fallthru
      _
    // Predicated region
    $region58: #{tpu_custom_call.1} parent=1 // pred_check
      _
    $region59: #{tpu_custom_call.1} parent=1 // pred_check_branch
      %1552 = sbr.rel (0) target = $region61
    $region60: #{tpu_custom_call.1} parent=1 // pred_region
      %1553 = dma.done [#allocation4], 2048
    $region61: #{tpu_custom_call.1} parent=1 // pred_fallthru
      _
    // Predicated region
    $region62: #{tpu_custom_call.1} parent=1 // pred_check
      _
    $region63: #{tpu_custom_call.1} parent=1 // pred_check_branch
      %1555 = sbr.rel (0) target = $region65
    $region64: #{tpu_custom_call.1} parent=1 // pred_region
      %1556 = dma.done [#allocation13], 2048
    $region65: #{tpu_custom_call.1} parent=1 // pred_fallthru
      _
    %1557 = vsyncpa [#allocation3], 1
    %1558 = vsyncpa [#allocation6], 1
    %1559 = vsyncpa [#allocation9], 1
    %1560 = vsyncpa [#allocation4], 1
    %1561 = vsyncpa [#allocation13], 1

</llo_original>
